<compile_context>
chip_gen: v5e
topology: v5e:2x2
jax: 0.10.0
libtpu: 0.0.40
codegen_flags: <defaults>
</compile_context>

<pallas_src>
import math
import numpy as np
import jax
import jax.numpy as jnp
from jax.experimental import pallas as pl
from jax.experimental.pallas import tpu as pltpu

# ---- model hyper-parameters (small, but shape-consistent with the module) ----
B = 2             # batch
S = 8             # sequence length
D_IN = 32         # config.hidden_size  (input feature dim)
HIDDEN = 64       # hidden_size of the transformer (module default 768, scaled down)
NUM_HEADS = 8     # num_heads
NUM_LAYERS = 2    # num_layers
FF = 128          # dim_feedforward (PyTorch default 2048, scaled down)
LABEL = 31        # label_length
LABEL_PAD = 128   # lane-dense padded label dim for the output head / store
HEAD_DIM = HIDDEN // NUM_HEADS
LN_EPS = 1e-5
NEG_BIG = -1e30   # pad bias so padded labels get exp(.) == 0 in the softmax

# ---- packed slab layout (all f32, lane width SLAB_W = 192) ----
SLAB_W = 3 * HIDDEN                                   # 192
LAYER_W_ROWS = 3 * HIDDEN + FF                        # wqkv(64)+wo(64)+wff1(64)+wff2(128) = 320
WOUT_OFF = D_IN + NUM_LAYERS * LAYER_W_ROWS           # 672
BD_OFF = WOUT_OFF + HIDDEN                            # 736  block-diag ones (64,64)
EXP_OFF = BD_OFF + HIDDEN                             # 800  expander (8,64)
EXPT_OFF = EXP_OFF + HEAD_DIM                         # 808  expander^T (64,8)
POOL_OFF = EXPT_OFF + HIDDEN                          # 872  pooling matrix (B, B*S)
W_SLAB_ROWS = ((POOL_OFF + B + 7) // 8) * 8           # 880
LAYER_B_ROWS = 8                                      # bqkv, bo, bff1, bff2, g1, be1, g2, be2
BOUT_ROW = 1 + NUM_LAYERS * LAYER_B_ROWS              # 17
B_SLAB_ROWS = BOUT_ROW + 1                            # 18


# ------------------------------ kernel helpers --------------------------------
def _mm(a, b):
    # (M, K) @ (K, N) -> (M, N); weights are stored K-major so all matmuls are plain NN.
    return jax.lax.dot_general(a, b, dimension_numbers=(((1,), (0,)), ((), ())),
                               preferred_element_type=jnp.float32)


def _layer_norm(x, g, b):
    mu = jnp.mean(x, axis=-1, keepdims=True)
    var = jnp.mean((x - mu) ** 2, axis=-1, keepdims=True)
    return (x - mu) * jax.lax.rsqrt(var + LN_EPS) * g + b


# --------------------------------- the kernel ---------------------------------
def transformer_prediction_kernel(x_ref, w_ref, b_ref, out_ref):
    # host-precomputed constants, loaded once (hoisted out of the unrolled layer loop)
    bd = w_ref[BD_OFF:BD_OFF + HIDDEN, 0:HIDDEN]                # (64,64) block-diag ones / mask
    expand = w_ref[EXP_OFF:EXP_OFF + HEAD_DIM, 0:HIDDEN]        # (8,64)  lane-tiled I_8
    expand_t = w_ref[EXPT_OFF:EXPT_OFF + HIDDEN, 0:HEAD_DIM]    # (64,8)  sublane-tiled I_8
    pool = w_ref[POOL_OFF:POOL_OFF + B, 0:B * S]                # (2,16)  1/S pooling matrix

    # input linear on the flattened batch: (B*S, D_IN) @ (D_IN, H)
    h = _mm(x_ref[...], w_ref[0:D_IN, 0:HIDDEN]) + b_ref[0:1, 0:HIDDEN]      # (16, 64)

    for l in range(NUM_LAYERS):
        wb = D_IN + l * LAYER_W_ROWS
        bb = 1 + l * LAYER_B_ROWS

        # ---- fused QKV projection (score scale already folded into the Q columns) ----
        qkv = _mm(h, w_ref[wb:wb + HIDDEN, :]) + b_ref[bb:bb + 1, :]         # (16, 192)
        q_all = qkv[:, 0:HIDDEN]
        k_all = qkv[:, HIDDEN:2 * HIDDEN]
        v_all = qkv[:, 2 * HIDDEN:3 * HIDDEN]

        # ---- per-batch block-diagonal attention: 2 full-width matmuls per batch ----
        ctx_rows = []
        for bt in range(B):
            r0 = bt * S
            q = q_all[r0:r0 + S, :]                                          # (8, 64), pre-scaled
            k = k_all[r0:r0 + S, :]
            v = v_all[r0:r0 + S, :]
            # K_bd[n*hd+d, n*hd+j] = k[j, n*hd+d]; V_bd[n*hd+j, n*hd+d] = v[j, n*hd+d]
            k_bd = _mm(k.T, expand) * bd                                     # (64, 64)
            v_bd = _mm(expand_t, v) * bd                                     # (64, 64)
            sc = _mm(q, k_bd)                                                # (8, 64): head n -> lanes n*8:(n+1)*8
            # batched softmax: per-row max is a per-row constant -> exact for each 8-lane head segment
            m = jnp.max(sc, axis=-1, keepdims=True)
            e = jnp.exp(sc - m)
            denom = _mm(e, bd)                                               # per-head segment sums, broadcast
            a = e * pl.reciprocal(denom, approx=True)
            ctx_rows.append(_mm(a, v_bd))                                    # (8, 64) already head-concatenated
        ctx = jnp.concatenate(ctx_rows, axis=0)                              # (16, 64)

        # ---- output projection + residual + post-norm ----
        attn = _mm(ctx, w_ref[wb + HIDDEN:wb + 2 * HIDDEN, 0:HIDDEN]) + b_ref[bb + 1:bb + 2, 0:HIDDEN]
        h = _layer_norm(h + attn, b_ref[bb + 4:bb + 5, 0:HIDDEN], b_ref[bb + 5:bb + 6, 0:HIDDEN])

        # ---- feed-forward (relu) on the flattened batch ----
        ff = jnp.maximum(
            _mm(h, w_ref[wb + 2 * HIDDEN:wb + 3 * HIDDEN, 0:FF]) + b_ref[bb + 2:bb + 3, 0:FF], 0.0)
        ff = _mm(ff, w_ref[wb + 3 * HIDDEN:wb + 3 * HIDDEN + FF, 0:HIDDEN]) + b_ref[bb + 3:bb + 4, 0:HIDDEN]
        h = _layer_norm(h + ff, b_ref[bb + 6:bb + 7, 0:HIDDEN], b_ref[bb + 7:bb + 8, 0:HIDDEN])

    # ---- pooling as a matmul, one dense output matmul, exact label softmax, one dense store ----
    pooled = _mm(pool, h)                                                    # (2, 64)
    logits = _mm(pooled, w_ref[WOUT_OFF:WOUT_OFF + HIDDEN, 0:LABEL_PAD]) \
        + b_ref[BOUT_ROW:BOUT_ROW + 1, 0:LABEL_PAD]                          # (2, 128), pads = -1e30
    mx = jnp.max(logits, axis=-1, keepdims=True)
    ex = jnp.exp(logits - mx)                                                # padded labels -> exactly 0
    out_ref[...] = ex / jnp.sum(ex, axis=-1, keepdims=True)


# --------------------------------- wrapper ------------------------------------
@jax.jit
def transformer_prediction(x, w_slab, b_slab):
    x_flat = x.reshape(B * S, D_IN)
    vmem = pl.BlockSpec(memory_space=pltpu.MemorySpace.VMEM)
    out_pad = pl.pallas_call(
        transformer_prediction_kernel,
        out_shape=jax.ShapeDtypeStruct((B, LABEL_PAD), jnp.float32),
        in_specs=[vmem, vmem, vmem],
        out_specs=vmem,
    )(x_flat, w_slab, b_slab)
    return out_pad[:, :LABEL]


# ------------------------------ parameter init --------------------------------
def init_params(key):
    ks = iter(jax.random.split(key, 32))
    f32 = jnp.float32

    def w(shape, s=0.02):
        return (s * jax.random.normal(next(ks), shape)).astype(f32)

    p = {}
    # all weights stored K-major (K, N) so the kernel uses plain NN matmuls
    p["w1"] = w((D_IN, HIDDEN))
    p["b1"] = w((1, HIDDEN))
    # fused QKV: columns [0:H]=Q, [H:2H]=K, [2H:3H]=V; head n occupies cols n*hd:(n+1)*hd
    p["wqkv"] = w((NUM_LAYERS, HIDDEN, 3 * HIDDEN))
    p["bqkv"] = w((NUM_LAYERS, 1, 3 * HIDDEN))
    p["wo"] = w((NUM_LAYERS, HIDDEN, HIDDEN))
    p["bo"] = w((NUM_LAYERS, 1, HIDDEN))
    p["wff1"] = w((NUM_LAYERS, HIDDEN, FF)); p["bff1"] = w((NUM_LAYERS, 1, FF))
    p["wff2"] = w((NUM_LAYERS, FF, HIDDEN)); p["bff2"] = w((NUM_LAYERS, 1, HIDDEN))
    p["g1"] = jnp.ones((NUM_LAYERS, 1, HIDDEN), f32); p["be1"] = jnp.zeros((NUM_LAYERS, 1, HIDDEN), f32)
    p["g2"] = jnp.ones((NUM_LAYERS, 1, HIDDEN), f32); p["be2"] = jnp.zeros((NUM_LAYERS, 1, HIDDEN), f32)
    p["wout"] = w((HIDDEN, LABEL))
    p["bout"] = w((1, LABEL))
    return p


def pack_params(p):
    """One-time host-side packing: scale folding, output-head padding, attention/pool constants,
    and concatenation of all weights / biases into two contiguous f32 slabs."""
    f32 = np.float32
    scale = f32(1.0 / math.sqrt(HEAD_DIM))
    w = np.zeros((W_SLAB_ROWS, SLAB_W), f32)
    bm = np.zeros((B_SLAB_ROWS, SLAB_W), f32)

    wqkv = np.array(p["wqkv"], f32)
    bqkv = np.array(p["bqkv"], f32)
    wqkv[:, :, :HIDDEN] *= scale          # fold 1/sqrt(hd) into the Q projection
    bqkv[:, :, :HIDDEN] *= scale

    w[0:D_IN, 0:HIDDEN] = np.array(p["w1"], f32)
    bm[0, 0:HIDDEN] = np.array(p["b1"], f32)[0]
    for l in range(NUM_LAYERS):
        wb = D_IN + l * LAYER_W_ROWS
        bb = 1 + l * LAYER_B_ROWS
        w[wb:wb + HIDDEN, 0:3 * HIDDEN] = wqkv[l]
        w[wb + HIDDEN:wb + 2 * HIDDEN, 0:HIDDEN] = np.array(p["wo"][l], f32)
        w[wb + 2 * HIDDEN:wb + 3 * HIDDEN, 0:FF] = np.array(p["wff1"][l], f32)
        w[wb + 3 * HIDDEN:wb + 3 * HIDDEN + FF, 0:HIDDEN] = np.array(p["wff2"][l], f32)
        bm[bb + 0, 0:3 * HIDDEN] = bqkv[l, 0]
        bm[bb + 1, 0:HIDDEN] = np.array(p["bo"][l], f32)[0]
        bm[bb + 2, 0:FF] = np.array(p["bff1"][l], f32)[0]
        bm[bb + 3, 0:HIDDEN] = np.array(p["bff2"][l], f32)[0]
        bm[bb + 4, 0:HIDDEN] = np.array(p["g1"][l], f32)[0]
        bm[bb + 5, 0:HIDDEN] = np.array(p["be1"][l], f32)[0]
        bm[bb + 6, 0:HIDDEN] = np.array(p["g2"][l], f32)[0]
        bm[bb + 7, 0:HIDDEN] = np.array(p["be2"][l], f32)[0]

    # output head padded to a lane-dense 128 columns; pad bias -> exp(.) == 0 in f32
    w[WOUT_OFF:WOUT_OFF + HIDDEN, 0:LABEL] = np.array(p["wout"], f32)
    bm[BOUT_ROW, 0:LABEL_PAD] = NEG_BIG
    bm[BOUT_ROW, 0:LABEL] = np.array(p["bout"], f32)[0]

    # attention / pooling constants
    eye_hd = np.eye(HEAD_DIM, dtype=f32)
    expand = np.tile(eye_hd, (1, NUM_HEADS))                                     # (8, 64)
    bd = np.kron(np.eye(NUM_HEADS, dtype=f32), np.ones((HEAD_DIM, HEAD_DIM), f32))  # (64, 64)
    pool = np.kron(np.eye(B, dtype=f32), np.full((1, S), 1.0 / S, dtype=f32))       # (2, 16)
    w[BD_OFF:BD_OFF + HIDDEN, 0:HIDDEN] = bd
    w[EXP_OFF:EXP_OFF + HEAD_DIM, 0:HIDDEN] = expand
    w[EXPT_OFF:EXPT_OFF + HIDDEN, 0:HEAD_DIM] = expand.T
    w[POOL_OFF:POOL_OFF + B, 0:B * S] = pool
    return jnp.asarray(w), jnp.asarray(bm)


# ---------------------------- pure-JAX reference ------------------------------
def reference_forward(x, p):
    def ln(v, g, b):
        mu = jnp.mean(v, axis=-1, keepdims=True)
        var = jnp.mean((v - mu) ** 2, axis=-1, keepdims=True)
        return (v - mu) / jnp.sqrt(var + LN_EPS) * g + b

    h = jnp.einsum("bsd,dh->bsh", x, p["w1"]) + p["b1"][0]
    for l in range(NUM_LAYERS):
        qkv = jnp.einsum("bsh,hk->bsk", h, p["wqkv"][l]) + p["bqkv"][l, 0]
        q = qkv[..., :HIDDEN].reshape(B, S, NUM_HEADS, HEAD_DIM)
        k = qkv[..., HIDDEN:2 * HIDDEN].reshape(B, S, NUM_HEADS, HEAD_DIM)
        v = qkv[..., 2 * HIDDEN:].reshape(B, S, NUM_HEADS, HEAD_DIM)
        sc = jnp.einsum("bqnd,bknd->bnqk", q, k) / math.sqrt(HEAD_DIM)
        a = jax.nn.softmax(sc, axis=-1)
        ctx = jnp.einsum("bnqk,bknd->bqnd", a, v).reshape(B, S, HIDDEN)
        attn_out = jnp.einsum("bsh,ho->bso", ctx, p["wo"][l]) + p["bo"][l, 0]
        h = ln(h + attn_out, p["g1"][l, 0], p["be1"][l, 0])
        ff = jax.nn.relu(jnp.einsum("bsh,hf->bsf", h, p["wff1"][l]) + p["bff1"][l, 0])
        ff = jnp.einsum("bsf,fh->bsh", ff, p["wff2"][l]) + p["bff2"][l, 0]
        h = ln(h + ff, p["g2"][l, 0], p["be2"][l, 0])
    pooled = jnp.mean(h, axis=1)                      # mean over seq (torch.mean(x, dim=0))
    logits = pooled @ p["wout"] + p["bout"][0]
    return jax.nn.softmax(logits, axis=1)


# ----------------------------------- main --------------------------------------
if __name__ == "__main__":
    key = jax.random.PRNGKey(0)
    kx, kp = jax.random.split(key)
    x = jax.random.normal(kx, (B, S, D_IN), dtype=jnp.float32)
    params = init_params(kp)
    w_slab, b_slab = pack_params(params)   # one-time packing / padding / constant building

    out = jax.block_until_ready(transformer_prediction(x, w_slab, b_slab))
    ref = jax.block_until_ready(reference_forward(x, params))

    assert out.shape == (B, LABEL)
    # attention softmax uses the EUP approximate reciprocal -> tolerance slightly relaxed
    assert jnp.allclose(out, ref, rtol=1e-3, atol=5e-5), (
        f"max abs err {jnp.max(jnp.abs(out - ref))}")
    print("KERNEL_OK")
</pallas_src>

<mosaic_0001>
module attributes {stable_mosaic.version = 11 : i64} {
  func.func @transformer_prediction_kernel(%arg0: memref<16x32xf32, #tpu.memory_space<vmem>>, %arg1: memref<880x192xf32, #tpu.memory_space<vmem>>, %arg2: memref<18x192xf32, #tpu.memory_space<vmem>>, %arg3: memref<2x128xf32, #tpu.memory_space<vmem>>) attributes {dimension_semantics = [], scalar_prefetch = 0 : i64, scratch_operands = 0 : i64, tpu.core_type = #tpu.core_type<tc>} {
    %c736 = arith.constant 736 : index
    %c0 = arith.constant 0 : index
    %0 = vector.load %arg1[%c736, %c0] : memref<880x192xf32, #tpu.memory_space<vmem>>, vector<64x64xf32>
    %c800 = arith.constant 800 : index
    %c0_0 = arith.constant 0 : index
    %1 = vector.load %arg1[%c800, %c0_0] : memref<880x192xf32, #tpu.memory_space<vmem>>, vector<8x64xf32>
    %c808 = arith.constant 808 : index
    %c0_1 = arith.constant 0 : index
    %2 = vector.load %arg1[%c808, %c0_1] : memref<880x192xf32, #tpu.memory_space<vmem>>, vector<64x8xf32>
    %c872 = arith.constant 872 : index
    %c0_2 = arith.constant 0 : index
    %3 = vector.load %arg1[%c872, %c0_2] : memref<880x192xf32, #tpu.memory_space<vmem>>, vector<2x16xf32>
    %c0_3 = arith.constant 0 : index
    %c0_4 = arith.constant 0 : index
    %4 = vector.load %arg0[%c0_3, %c0_4] : memref<16x32xf32, #tpu.memory_space<vmem>>, vector<16x32xf32>
    %c0_5 = arith.constant 0 : index
    %c0_6 = arith.constant 0 : index
    %5 = vector.load %arg1[%c0_5, %c0_6] : memref<880x192xf32, #tpu.memory_space<vmem>>, vector<32x64xf32>
    %cst = arith.constant dense<0.000000e+00> : vector<16x64xf32>
    %6 = tpu.matmul %4, %5, %cst {dimension_numbers = #tpu.dot_dimension_numbers<[1], [0], [0], [1], [0, 0, 1, 1], [], []>} : vector<16x32xf32>, vector<32x64xf32>, vector<16x64xf32> -> vector<16x64xf32>
    %c0_7 = arith.constant 0 : index
    %c0_8 = arith.constant 0 : index
    %7 = vector.load %arg2[%c0_7, %c0_8] : memref<18x192xf32, #tpu.memory_space<vmem>>, vector<1x64xf32>
    %8 = vector.broadcast %7 : vector<1x64xf32> to vector<16x64xf32>
    %9 = arith.addf %6, %8 : vector<16x64xf32>
    %c32 = arith.constant 32 : index
    %c0_9 = arith.constant 0 : index
    %10 = vector.load %arg1[%c32, %c0_9] : memref<880x192xf32, #tpu.memory_space<vmem>>, vector<64x192xf32>
    %cst_10 = arith.constant dense<0.000000e+00> : vector<16x192xf32>
    %11 = tpu.matmul %9, %10, %cst_10 {dimension_numbers = #tpu.dot_dimension_numbers<[1], [0], [0], [1], [0, 0, 1, 1], [], []>} : vector<16x64xf32>, vector<64x192xf32>, vector<16x192xf32> -> vector<16x192xf32>
    %c1 = arith.constant 1 : index
    %c0_11 = arith.constant 0 : index
    %12 = vector.load %arg2[%c1, %c0_11] : memref<18x192xf32, #tpu.memory_space<vmem>>, vector<1x192xf32>
    %13 = vector.broadcast %12 : vector<1x192xf32> to vector<16x192xf32>
    %14 = arith.addf %11, %13 : vector<16x192xf32>
    %15 = vector.extract_strided_slice %14 {offsets = [0, 0], sizes = [16, 64], strides = [1, 1]} : vector<16x192xf32> to vector<16x64xf32>
    %16 = vector.extract_strided_slice %14 {offsets = [0, 64], sizes = [16, 64], strides = [1, 1]} : vector<16x192xf32> to vector<16x64xf32>
    %17 = vector.extract_strided_slice %14 {offsets = [0, 128], sizes = [16, 64], strides = [1, 1]} : vector<16x192xf32> to vector<16x64xf32>
    %18 = vector.extract_strided_slice %15 {offsets = [0, 0], sizes = [8, 64], strides = [1, 1]} : vector<16x64xf32> to vector<8x64xf32>
    %19 = vector.extract_strided_slice %16 {offsets = [0, 0], sizes = [8, 64], strides = [1, 1]} : vector<16x64xf32> to vector<8x64xf32>
    %20 = vector.extract_strided_slice %17 {offsets = [0, 0], sizes = [8, 64], strides = [1, 1]} : vector<16x64xf32> to vector<8x64xf32>
    %21 = tpu.transpose %19, [1, 0] : vector<8x64xf32> -> vector<64x8xf32>
    %cst_12 = arith.constant dense<0.000000e+00> : vector<64x64xf32>
    %22 = tpu.matmul %21, %1, %cst_12 {dimension_numbers = #tpu.dot_dimension_numbers<[1], [0], [0], [1], [0, 0, 1, 1], [], []>} : vector<64x8xf32>, vector<8x64xf32>, vector<64x64xf32> -> vector<64x64xf32>
    %23 = arith.mulf %22, %0 : vector<64x64xf32>
    %cst_13 = arith.constant dense<0.000000e+00> : vector<64x64xf32>
    %24 = tpu.matmul %2, %20, %cst_13 {dimension_numbers = #tpu.dot_dimension_numbers<[1], [0], [0], [1], [0, 0, 1, 1], [], []>} : vector<64x8xf32>, vector<8x64xf32>, vector<64x64xf32> -> vector<64x64xf32>
    %25 = arith.mulf %24, %0 : vector<64x64xf32>
    %cst_14 = arith.constant dense<0.000000e+00> : vector<8x64xf32>
    %26 = tpu.matmul %18, %23, %cst_14 {dimension_numbers = #tpu.dot_dimension_numbers<[1], [0], [0], [1], [0, 0, 1, 1], [], []>} : vector<8x64xf32>, vector<64x64xf32>, vector<8x64xf32> -> vector<8x64xf32>
    %cst_15 = arith.constant dense<0xFF800000> : vector<8xf32>
    %27 = vector.multi_reduction <maximumf>, %26, %cst_15 [1] : vector<8x64xf32> to vector<8xf32>
    %28 = vector.shape_cast %27 : vector<8xf32> to vector<8x1xf32>
    %29 = vector.broadcast %28 : vector<8x1xf32> to vector<8x64xf32>
    %30 = arith.subf %26, %29 : vector<8x64xf32>
    %31 = math.exp %30 : vector<8x64xf32>
    %cst_16 = arith.constant dense<0.000000e+00> : vector<8x64xf32>
    %32 = tpu.matmul %31, %0, %cst_16 {dimension_numbers = #tpu.dot_dimension_numbers<[1], [0], [0], [1], [0, 0, 1, 1], [], []>} : vector<8x64xf32>, vector<64x64xf32>, vector<8x64xf32> -> vector<8x64xf32>
    %33 = tpu.reciprocal %32 {approx = true} : vector<8x64xf32> -> vector<8x64xf32>
    %34 = arith.mulf %31, %33 : vector<8x64xf32>
    %cst_17 = arith.constant dense<0.000000e+00> : vector<8x64xf32>
    %35 = tpu.matmul %34, %25, %cst_17 {dimension_numbers = #tpu.dot_dimension_numbers<[1], [0], [0], [1], [0, 0, 1, 1], [], []>} : vector<8x64xf32>, vector<64x64xf32>, vector<8x64xf32> -> vector<8x64xf32>
    %36 = vector.extract_strided_slice %15 {offsets = [8, 0], sizes = [8, 64], strides = [1, 1]} : vector<16x64xf32> to vector<8x64xf32>
    %37 = vector.extract_strided_slice %16 {offsets = [8, 0], sizes = [8, 64], strides = [1, 1]} : vector<16x64xf32> to vector<8x64xf32>
    %38 = vector.extract_strided_slice %17 {offsets = [8, 0], sizes = [8, 64], strides = [1, 1]} : vector<16x64xf32> to vector<8x64xf32>
    %39 = tpu.transpose %37, [1, 0] : vector<8x64xf32> -> vector<64x8xf32>
    %cst_18 = arith.constant dense<0.000000e+00> : vector<64x64xf32>
    %40 = tpu.matmul %39, %1, %cst_18 {dimension_numbers = #tpu.dot_dimension_numbers<[1], [0], [0], [1], [0, 0, 1, 1], [], []>} : vector<64x8xf32>, vector<8x64xf32>, vector<64x64xf32> -> vector<64x64xf32>
    %41 = arith.mulf %40, %0 : vector<64x64xf32>
    %cst_19 = arith.constant dense<0.000000e+00> : vector<64x64xf32>
    %42 = tpu.matmul %2, %38, %cst_19 {dimension_numbers = #tpu.dot_dimension_numbers<[1], [0], [0], [1], [0, 0, 1, 1], [], []>} : vector<64x8xf32>, vector<8x64xf32>, vector<64x64xf32> -> vector<64x64xf32>
    %43 = arith.mulf %42, %0 : vector<64x64xf32>
    %cst_20 = arith.constant dense<0.000000e+00> : vector<8x64xf32>
    %44 = tpu.matmul %36, %41, %cst_20 {dimension_numbers = #tpu.dot_dimension_numbers<[1], [0], [0], [1], [0, 0, 1, 1], [], []>} : vector<8x64xf32>, vector<64x64xf32>, vector<8x64xf32> -> vector<8x64xf32>
    %cst_21 = arith.constant dense<0xFF800000> : vector<8xf32>
    %45 = vector.multi_reduction <maximumf>, %44, %cst_21 [1] : vector<8x64xf32> to vector<8xf32>
    %46 = vector.shape_cast %45 : vector<8xf32> to vector<8x1xf32>
    %47 = vector.broadcast %46 : vector<8x1xf32> to vector<8x64xf32>
    %48 = arith.subf %44, %47 : vector<8x64xf32>
    %49 = math.exp %48 : vector<8x64xf32>
    %cst_22 = arith.constant dense<0.000000e+00> : vector<8x64xf32>
    %50 = tpu.matmul %49, %0, %cst_22 {dimension_numbers = #tpu.dot_dimension_numbers<[1], [0], [0], [1], [0, 0, 1, 1], [], []>} : vector<8x64xf32>, vector<64x64xf32>, vector<8x64xf32> -> vector<8x64xf32>
    %51 = tpu.reciprocal %50 {approx = true} : vector<8x64xf32> -> vector<8x64xf32>
    %52 = arith.mulf %49, %51 : vector<8x64xf32>
    %cst_23 = arith.constant dense<0.000000e+00> : vector<8x64xf32>
    %53 = tpu.matmul %52, %43, %cst_23 {dimension_numbers = #tpu.dot_dimension_numbers<[1], [0], [0], [1], [0, 0, 1, 1], [], []>} : vector<8x64xf32>, vector<64x64xf32>, vector<8x64xf32> -> vector<8x64xf32>
    %54 = tpu.concatenate %35, %53 in 0 : vector<8x64xf32>, vector<8x64xf32> -> vector<16x64xf32>
    %c96 = arith.constant 96 : index
    %c0_24 = arith.constant 0 : index
    %55 = vector.load %arg1[%c96, %c0_24] : memref<880x192xf32, #tpu.memory_space<vmem>>, vector<64x64xf32>
    %cst_25 = arith.constant dense<0.000000e+00> : vector<16x64xf32>
    %56 = tpu.matmul %54, %55, %cst_25 {dimension_numbers = #tpu.dot_dimension_numbers<[1], [0], [0], [1], [0, 0, 1, 1], [], []>} : vector<16x64xf32>, vector<64x64xf32>, vector<16x64xf32> -> vector<16x64xf32>
    %c2 = arith.constant 2 : index
    %c0_26 = arith.constant 0 : index
    %57 = vector.load %arg2[%c2, %c0_26] : memref<18x192xf32, #tpu.memory_space<vmem>>, vector<1x64xf32>
    %58 = vector.broadcast %57 : vector<1x64xf32> to vector<16x64xf32>
    %59 = arith.addf %56, %58 : vector<16x64xf32>
    %60 = arith.addf %9, %59 : vector<16x64xf32>
    %c5 = arith.constant 5 : index
    %c0_27 = arith.constant 0 : index
    %61 = vector.load %arg2[%c5, %c0_27] : memref<18x192xf32, #tpu.memory_space<vmem>>, vector<1x64xf32>
    %c6 = arith.constant 6 : index
    %c0_28 = arith.constant 0 : index
    %62 = vector.load %arg2[%c6, %c0_28] : memref<18x192xf32, #tpu.memory_space<vmem>>, vector<1x64xf32>
    %cst_29 = arith.constant dense<0.000000e+00> : vector<16xf32>
    %63 = vector.multi_reduction <add>, %60, %cst_29 [1] : vector<16x64xf32> to vector<16xf32>
    %64 = vector.shape_cast %63 : vector<16xf32> to vector<16x1xf32>
    %cst_30 = arith.constant 6.400000e+01 : f32
    %65 = vector.broadcast %cst_30 : f32 to vector<16x1xf32>
    %66 = arith.divf %64, %65 : vector<16x1xf32>
    %67 = vector.broadcast %66 : vector<16x1xf32> to vector<16x64xf32>
    %68 = arith.subf %60, %67 : vector<16x64xf32>
    %69 = arith.mulf %68, %68 : vector<16x64xf32>
    %cst_31 = arith.constant dense<0.000000e+00> : vector<16xf32>
    %70 = vector.multi_reduction <add>, %69, %cst_31 [1] : vector<16x64xf32> to vector<16xf32>
    %71 = vector.shape_cast %70 : vector<16xf32> to vector<16x1xf32>
    %cst_32 = arith.constant 6.400000e+01 : f32
    %72 = vector.broadcast %cst_32 : f32 to vector<16x1xf32>
    %73 = arith.divf %71, %72 : vector<16x1xf32>
    %74 = vector.broadcast %66 : vector<16x1xf32> to vector<16x64xf32>
    %75 = arith.subf %60, %74 : vector<16x64xf32>
    %cst_33 = arith.constant 9.99999974E-6 : f32
    %76 = vector.broadcast %cst_33 : f32 to vector<16x1xf32>
    %77 = arith.addf %73, %76 : vector<16x1xf32>
    %78 = math.rsqrt %77 : vector<16x1xf32>
    %79 = vector.broadcast %78 : vector<16x1xf32> to vector<16x64xf32>
    %80 = arith.mulf %75, %79 : vector<16x64xf32>
    %81 = vector.broadcast %61 : vector<1x64xf32> to vector<16x64xf32>
    %82 = arith.mulf %80, %81 : vector<16x64xf32>
    %83 = vector.broadcast %62 : vector<1x64xf32> to vector<16x64xf32>
    %84 = arith.addf %82, %83 : vector<16x64xf32>
    %c160 = arith.constant 160 : index
    %c0_34 = arith.constant 0 : index
    %85 = vector.load %arg1[%c160, %c0_34] : memref<880x192xf32, #tpu.memory_space<vmem>>, vector<64x128xf32>
    %cst_35 = arith.constant dense<0.000000e+00> : vector<16x128xf32>
    %86 = tpu.matmul %84, %85, %cst_35 {dimension_numbers = #tpu.dot_dimension_numbers<[1], [0], [0], [1], [0, 0, 1, 1], [], []>} : vector<16x64xf32>, vector<64x128xf32>, vector<16x128xf32> -> vector<16x128xf32>
    %c3 = arith.constant 3 : index
    %c0_36 = arith.constant 0 : index
    %87 = vector.load %arg2[%c3, %c0_36] : memref<18x192xf32, #tpu.memory_space<vmem>>, vector<1x128xf32>
    %88 = vector.broadcast %87 : vector<1x128xf32> to vector<16x128xf32>
    %89 = arith.addf %86, %88 : vector<16x128xf32>
    %cst_37 = arith.constant 0.000000e+00 : f32
    %90 = vector.broadcast %cst_37 : f32 to vector<16x128xf32>
    %91 = arith.maximumf %89, %90 : vector<16x128xf32>
    %c224 = arith.constant 224 : index
    %c0_38 = arith.constant 0 : index
    %92 = vector.load %arg1[%c224, %c0_38] : memref<880x192xf32, #tpu.memory_space<vmem>>, vector<128x64xf32>
    %cst_39 = arith.constant dense<0.000000e+00> : vector<16x64xf32>
    %93 = tpu.matmul %91, %92, %cst_39 {dimension_numbers = #tpu.dot_dimension_numbers<[1], [0], [0], [1], [0, 0, 1, 1], [], []>} : vector<16x128xf32>, vector<128x64xf32>, vector<16x64xf32> -> vector<16x64xf32>
    %c4 = arith.constant 4 : index
    %c0_40 = arith.constant 0 : index
    %94 = vector.load %arg2[%c4, %c0_40] : memref<18x192xf32, #tpu.memory_space<vmem>>, vector<1x64xf32>
    %95 = vector.broadcast %94 : vector<1x64xf32> to vector<16x64xf32>
    %96 = arith.addf %93, %95 : vector<16x64xf32>
    %97 = arith.addf %84, %96 : vector<16x64xf32>
    %c7 = arith.constant 7 : index
    %c0_41 = arith.constant 0 : index
    %98 = vector.load %arg2[%c7, %c0_41] : memref<18x192xf32, #tpu.memory_space<vmem>>, vector<1x64xf32>
    %c8 = arith.constant 8 : index
    %c0_42 = arith.constant 0 : index
    %99 = vector.load %arg2[%c8, %c0_42] : memref<18x192xf32, #tpu.memory_space<vmem>>, vector<1x64xf32>
    %cst_43 = arith.constant dense<0.000000e+00> : vector<16xf32>
    %100 = vector.multi_reduction <add>, %97, %cst_43 [1] : vector<16x64xf32> to vector<16xf32>
    %101 = vector.shape_cast %100 : vector<16xf32> to vector<16x1xf32>
    %cst_44 = arith.constant 6.400000e+01 : f32
    %102 = vector.broadcast %cst_44 : f32 to vector<16x1xf32>
    %103 = arith.divf %101, %102 : vector<16x1xf32>
    %104 = vector.broadcast %103 : vector<16x1xf32> to vector<16x64xf32>
    %105 = arith.subf %97, %104 : vector<16x64xf32>
    %106 = arith.mulf %105, %105 : vector<16x64xf32>
    %cst_45 = arith.constant dense<0.000000e+00> : vector<16xf32>
    %107 = vector.multi_reduction <add>, %106, %cst_45 [1] : vector<16x64xf32> to vector<16xf32>
    %108 = vector.shape_cast %107 : vector<16xf32> to vector<16x1xf32>
    %cst_46 = arith.constant 6.400000e+01 : f32
    %109 = vector.broadcast %cst_46 : f32 to vector<16x1xf32>
    %110 = arith.divf %108, %109 : vector<16x1xf32>
    %111 = vector.broadcast %103 : vector<16x1xf32> to vector<16x64xf32>
    %112 = arith.subf %97, %111 : vector<16x64xf32>
    %cst_47 = arith.constant 9.99999974E-6 : f32
    %113 = vector.broadcast %cst_47 : f32 to vector<16x1xf32>
    %114 = arith.addf %110, %113 : vector<16x1xf32>
    %115 = math.rsqrt %114 : vector<16x1xf32>
    %116 = vector.broadcast %115 : vector<16x1xf32> to vector<16x64xf32>
    %117 = arith.mulf %112, %116 : vector<16x64xf32>
    %118 = vector.broadcast %98 : vector<1x64xf32> to vector<16x64xf32>
    %119 = arith.mulf %117, %118 : vector<16x64xf32>
    %120 = vector.broadcast %99 : vector<1x64xf32> to vector<16x64xf32>
    %121 = arith.addf %119, %120 : vector<16x64xf32>
    %c352 = arith.constant 352 : index
    %c0_48 = arith.constant 0 : index
    %122 = vector.load %arg1[%c352, %c0_48] : memref<880x192xf32, #tpu.memory_space<vmem>>, vector<64x192xf32>
    %cst_49 = arith.constant dense<0.000000e+00> : vector<16x192xf32>
    %123 = tpu.matmul %121, %122, %cst_49 {dimension_numbers = #tpu.dot_dimension_numbers<[1], [0], [0], [1], [0, 0, 1, 1], [], []>} : vector<16x64xf32>, vector<64x192xf32>, vector<16x192xf32> -> vector<16x192xf32>
    %c9 = arith.constant 9 : index
    %c0_50 = arith.constant 0 : index
    %124 = vector.load %arg2[%c9, %c0_50] : memref<18x192xf32, #tpu.memory_space<vmem>>, vector<1x192xf32>
    %125 = vector.broadcast %124 : vector<1x192xf32> to vector<16x192xf32>
    %126 = arith.addf %123, %125 : vector<16x192xf32>
    %127 = vector.extract_strided_slice %126 {offsets = [0, 0], sizes = [16, 64], strides = [1, 1]} : vector<16x192xf32> to vector<16x64xf32>
    %128 = vector.extract_strided_slice %126 {offsets = [0, 64], sizes = [16, 64], strides = [1, 1]} : vector<16x192xf32> to vector<16x64xf32>
    %129 = vector.extract_strided_slice %126 {offsets = [0, 128], sizes = [16, 64], strides = [1, 1]} : vector<16x192xf32> to vector<16x64xf32>
    %130 = vector.extract_strided_slice %127 {offsets = [0, 0], sizes = [8, 64], strides = [1, 1]} : vector<16x64xf32> to vector<8x64xf32>
    %131 = vector.extract_strided_slice %128 {offsets = [0, 0], sizes = [8, 64], strides = [1, 1]} : vector<16x64xf32> to vector<8x64xf32>
    %132 = vector.extract_strided_slice %129 {offsets = [0, 0], sizes = [8, 64], strides = [1, 1]} : vector<16x64xf32> to vector<8x64xf32>
    %133 = tpu.transpose %131, [1, 0] : vector<8x64xf32> -> vector<64x8xf32>
    %cst_51 = arith.constant dense<0.000000e+00> : vector<64x64xf32>
    %134 = tpu.matmul %133, %1, %cst_51 {dimension_numbers = #tpu.dot_dimension_numbers<[1], [0], [0], [1], [0, 0, 1, 1], [], []>} : vector<64x8xf32>, vector<8x64xf32>, vector<64x64xf32> -> vector<64x64xf32>
    %135 = arith.mulf %134, %0 : vector<64x64xf32>
    %cst_52 = arith.constant dense<0.000000e+00> : vector<64x64xf32>
    %136 = tpu.matmul %2, %132, %cst_52 {dimension_numbers = #tpu.dot_dimension_numbers<[1], [0], [0], [1], [0, 0, 1, 1], [], []>} : vector<64x8xf32>, vector<8x64xf32>, vector<64x64xf32> -> vector<64x64xf32>
    %137 = arith.mulf %136, %0 : vector<64x64xf32>
    %cst_53 = arith.constant dense<0.000000e+00> : vector<8x64xf32>
    %138 = tpu.matmul %130, %135, %cst_53 {dimension_numbers = #tpu.dot_dimension_numbers<[1], [0], [0], [1], [0, 0, 1, 1], [], []>} : vector<8x64xf32>, vector<64x64xf32>, vector<8x64xf32> -> vector<8x64xf32>
    %cst_54 = arith.constant dense<0xFF800000> : vector<8xf32>
    %139 = vector.multi_reduction <maximumf>, %138, %cst_54 [1] : vector<8x64xf32> to vector<8xf32>
    %140 = vector.shape_cast %139 : vector<8xf32> to vector<8x1xf32>
    %141 = vector.broadcast %140 : vector<8x1xf32> to vector<8x64xf32>
    %142 = arith.subf %138, %141 : vector<8x64xf32>
    %143 = math.exp %142 : vector<8x64xf32>
    %cst_55 = arith.constant dense<0.000000e+00> : vector<8x64xf32>
    %144 = tpu.matmul %143, %0, %cst_55 {dimension_numbers = #tpu.dot_dimension_numbers<[1], [0], [0], [1], [0, 0, 1, 1], [], []>} : vector<8x64xf32>, vector<64x64xf32>, vector<8x64xf32> -> vector<8x64xf32>
    %145 = tpu.reciprocal %144 {approx = true} : vector<8x64xf32> -> vector<8x64xf32>
    %146 = arith.mulf %143, %145 : vector<8x64xf32>
    %cst_56 = arith.constant dense<0.000000e+00> : vector<8x64xf32>
    %147 = tpu.matmul %146, %137, %cst_56 {dimension_numbers = #tpu.dot_dimension_numbers<[1], [0], [0], [1], [0, 0, 1, 1], [], []>} : vector<8x64xf32>, vector<64x64xf32>, vector<8x64xf32> -> vector<8x64xf32>
    %148 = vector.extract_strided_slice %127 {offsets = [8, 0], sizes = [8, 64], strides = [1, 1]} : vector<16x64xf32> to vector<8x64xf32>
    %149 = vector.extract_strided_slice %128 {offsets = [8, 0], sizes = [8, 64], strides = [1, 1]} : vector<16x64xf32> to vector<8x64xf32>
    %150 = vector.extract_strided_slice %129 {offsets = [8, 0], sizes = [8, 64], strides = [1, 1]} : vector<16x64xf32> to vector<8x64xf32>
    %151 = tpu.transpose %149, [1, 0] : vector<8x64xf32> -> vector<64x8xf32>
    %cst_57 = arith.constant dense<0.000000e+00> : vector<64x64xf32>
    %152 = tpu.matmul %151, %1, %cst_57 {dimension_numbers = #tpu.dot_dimension_numbers<[1], [0], [0], [1], [0, 0, 1, 1], [], []>} : vector<64x8xf32>, vector<8x64xf32>, vector<64x64xf32> -> vector<64x64xf32>
    %153 = arith.mulf %152, %0 : vector<64x64xf32>
    %cst_58 = arith.constant dense<0.000000e+00> : vector<64x64xf32>
    %154 = tpu.matmul %2, %150, %cst_58 {dimension_numbers = #tpu.dot_dimension_numbers<[1], [0], [0], [1], [0, 0, 1, 1], [], []>} : vector<64x8xf32>, vector<8x64xf32>, vector<64x64xf32> -> vector<64x64xf32>
    %155 = arith.mulf %154, %0 : vector<64x64xf32>
    %cst_59 = arith.constant dense<0.000000e+00> : vector<8x64xf32>
    %156 = tpu.matmul %148, %153, %cst_59 {dimension_numbers = #tpu.dot_dimension_numbers<[1], [0], [0], [1], [0, 0, 1, 1], [], []>} : vector<8x64xf32>, vector<64x64xf32>, vector<8x64xf32> -> vector<8x64xf32>
    %cst_60 = arith.constant dense<0xFF800000> : vector<8xf32>
    %157 = vector.multi_reduction <maximumf>, %156, %cst_60 [1] : vector<8x64xf32> to vector<8xf32>
    %158 = vector.shape_cast %157 : vector<8xf32> to vector<8x1xf32>
    %159 = vector.broadcast %158 : vector<8x1xf32> to vector<8x64xf32>
    %160 = arith.subf %156, %159 : vector<8x64xf32>
    %161 = math.exp %160 : vector<8x64xf32>
    %cst_61 = arith.constant dense<0.000000e+00> : vector<8x64xf32>
    %162 = tpu.matmul %161, %0, %cst_61 {dimension_numbers = #tpu.dot_dimension_numbers<[1], [0], [0], [1], [0, 0, 1, 1], [], []>} : vector<8x64xf32>, vector<64x64xf32>, vector<8x64xf32> -> vector<8x64xf32>
    %163 = tpu.reciprocal %162 {approx = true} : vector<8x64xf32> -> vector<8x64xf32>
    %164 = arith.mulf %161, %163 : vector<8x64xf32>
    %cst_62 = arith.constant dense<0.000000e+00> : vector<8x64xf32>
    %165 = tpu.matmul %164, %155, %cst_62 {dimension_numbers = #tpu.dot_dimension_numbers<[1], [0], [0], [1], [0, 0, 1, 1], [], []>} : vector<8x64xf32>, vector<64x64xf32>, vector<8x64xf32> -> vector<8x64xf32>
    %166 = tpu.concatenate %147, %165 in 0 : vector<8x64xf32>, vector<8x64xf32> -> vector<16x64xf32>
    %c416 = arith.constant 416 : index
    %c0_63 = arith.constant 0 : index
    %167 = vector.load %arg1[%c416, %c0_63] : memref<880x192xf32, #tpu.memory_space<vmem>>, vector<64x64xf32>
    %cst_64 = arith.constant dense<0.000000e+00> : vector<16x64xf32>
    %168 = tpu.matmul %166, %167, %cst_64 {dimension_numbers = #tpu.dot_dimension_numbers<[1], [0], [0], [1], [0, 0, 1, 1], [], []>} : vector<16x64xf32>, vector<64x64xf32>, vector<16x64xf32> -> vector<16x64xf32>
    %c10 = arith.constant 10 : index
    %c0_65 = arith.constant 0 : index
    %169 = vector.load %arg2[%c10, %c0_65] : memref<18x192xf32, #tpu.memory_space<vmem>>, vector<1x64xf32>
    %170 = vector.broadcast %169 : vector<1x64xf32> to vector<16x64xf32>
    %171 = arith.addf %168, %170 : vector<16x64xf32>
    %172 = arith.addf %121, %171 : vector<16x64xf32>
    %c13 = arith.constant 13 : index
    %c0_66 = arith.constant 0 : index
    %173 = vector.load %arg2[%c13, %c0_66] : memref<18x192xf32, #tpu.memory_space<vmem>>, vector<1x64xf32>
    %c14 = arith.constant 14 : index
    %c0_67 = arith.constant 0 : index
    %174 = vector.load %arg2[%c14, %c0_67] : memref<18x192xf32, #tpu.memory_space<vmem>>, vector<1x64xf32>
    %cst_68 = arith.constant dense<0.000000e+00> : vector<16xf32>
    %175 = vector.multi_reduction <add>, %172, %cst_68 [1] : vector<16x64xf32> to vector<16xf32>
    %176 = vector.shape_cast %175 : vector<16xf32> to vector<16x1xf32>
    %cst_69 = arith.constant 6.400000e+01 : f32
    %177 = vector.broadcast %cst_69 : f32 to vector<16x1xf32>
    %178 = arith.divf %176, %177 : vector<16x1xf32>
    %179 = vector.broadcast %178 : vector<16x1xf32> to vector<16x64xf32>
    %180 = arith.subf %172, %179 : vector<16x64xf32>
    %181 = arith.mulf %180, %180 : vector<16x64xf32>
    %cst_70 = arith.constant dense<0.000000e+00> : vector<16xf32>
    %182 = vector.multi_reduction <add>, %181, %cst_70 [1] : vector<16x64xf32> to vector<16xf32>
    %183 = vector.shape_cast %182 : vector<16xf32> to vector<16x1xf32>
    %cst_71 = arith.constant 6.400000e+01 : f32
    %184 = vector.broadcast %cst_71 : f32 to vector<16x1xf32>
    %185 = arith.divf %183, %184 : vector<16x1xf32>
    %186 = vector.broadcast %178 : vector<16x1xf32> to vector<16x64xf32>
    %187 = arith.subf %172, %186 : vector<16x64xf32>
    %cst_72 = arith.constant 9.99999974E-6 : f32
    %188 = vector.broadcast %cst_72 : f32 to vector<16x1xf32>
    %189 = arith.addf %185, %188 : vector<16x1xf32>
    %190 = math.rsqrt %189 : vector<16x1xf32>
    %191 = vector.broadcast %190 : vector<16x1xf32> to vector<16x64xf32>
    %192 = arith.mulf %187, %191 : vector<16x64xf32>
    %193 = vector.broadcast %173 : vector<1x64xf32> to vector<16x64xf32>
    %194 = arith.mulf %192, %193 : vector<16x64xf32>
    %195 = vector.broadcast %174 : vector<1x64xf32> to vector<16x64xf32>
    %196 = arith.addf %194, %195 : vector<16x64xf32>
    %c480 = arith.constant 480 : index
    %c0_73 = arith.constant 0 : index
    %197 = vector.load %arg1[%c480, %c0_73] : memref<880x192xf32, #tpu.memory_space<vmem>>, vector<64x128xf32>
    %cst_74 = arith.constant dense<0.000000e+00> : vector<16x128xf32>
    %198 = tpu.matmul %196, %197, %cst_74 {dimension_numbers = #tpu.dot_dimension_numbers<[1], [0], [0], [1], [0, 0, 1, 1], [], []>} : vector<16x64xf32>, vector<64x128xf32>, vector<16x128xf32> -> vector<16x128xf32>
    %c11 = arith.constant 11 : index
    %c0_75 = arith.constant 0 : index
    %199 = vector.load %arg2[%c11, %c0_75] : memref<18x192xf32, #tpu.memory_space<vmem>>, vector<1x128xf32>
    %200 = vector.broadcast %199 : vector<1x128xf32> to vector<16x128xf32>
    %201 = arith.addf %198, %200 : vector<16x128xf32>
    %cst_76 = arith.constant 0.000000e+00 : f32
    %202 = vector.broadcast %cst_76 : f32 to vector<16x128xf32>
    %203 = arith.maximumf %201, %202 : vector<16x128xf32>
    %c544 = arith.constant 544 : index
    %c0_77 = arith.constant 0 : index
    %204 = vector.load %arg1[%c544, %c0_77] : memref<880x192xf32, #tpu.memory_space<vmem>>, vector<128x64xf32>
    %cst_78 = arith.constant dense<0.000000e+00> : vector<16x64xf32>
    %205 = tpu.matmul %203, %204, %cst_78 {dimension_numbers = #tpu.dot_dimension_numbers<[1], [0], [0], [1], [0, 0, 1, 1], [], []>} : vector<16x128xf32>, vector<128x64xf32>, vector<16x64xf32> -> vector<16x64xf32>
    %c12 = arith.constant 12 : index
    %c0_79 = arith.constant 0 : index
    %206 = vector.load %arg2[%c12, %c0_79] : memref<18x192xf32, #tpu.memory_space<vmem>>, vector<1x64xf32>
    %207 = vector.broadcast %206 : vector<1x64xf32> to vector<16x64xf32>
    %208 = arith.addf %205, %207 : vector<16x64xf32>
    %209 = arith.addf %196, %208 : vector<16x64xf32>
    %c15 = arith.constant 15 : index
    %c0_80 = arith.constant 0 : index
    %210 = vector.load %arg2[%c15, %c0_80] : memref<18x192xf32, #tpu.memory_space<vmem>>, vector<1x64xf32>
    %c16 = arith.constant 16 : index
    %c0_81 = arith.constant 0 : index
    %211 = vector.load %arg2[%c16, %c0_81] : memref<18x192xf32, #tpu.memory_space<vmem>>, vector<1x64xf32>
    %cst_82 = arith.constant dense<0.000000e+00> : vector<16xf32>
    %212 = vector.multi_reduction <add>, %209, %cst_82 [1] : vector<16x64xf32> to vector<16xf32>
    %213 = vector.shape_cast %212 : vector<16xf32> to vector<16x1xf32>
    %cst_83 = arith.constant 6.400000e+01 : f32
    %214 = vector.broadcast %cst_83 : f32 to vector<16x1xf32>
    %215 = arith.divf %213, %214 : vector<16x1xf32>
    %216 = vector.broadcast %215 : vector<16x1xf32> to vector<16x64xf32>
    %217 = arith.subf %209, %216 : vector<16x64xf32>
    %218 = arith.mulf %217, %217 : vector<16x64xf32>
    %cst_84 = arith.constant dense<0.000000e+00> : vector<16xf32>
    %219 = vector.multi_reduction <add>, %218, %cst_84 [1] : vector<16x64xf32> to vector<16xf32>
    %220 = vector.shape_cast %219 : vector<16xf32> to vector<16x1xf32>
    %cst_85 = arith.constant 6.400000e+01 : f32
    %221 = vector.broadcast %cst_85 : f32 to vector<16x1xf32>
    %222 = arith.divf %220, %221 : vector<16x1xf32>
    %223 = vector.broadcast %215 : vector<16x1xf32> to vector<16x64xf32>
    %224 = arith.subf %209, %223 : vector<16x64xf32>
    %cst_86 = arith.constant 9.99999974E-6 : f32
    %225 = vector.broadcast %cst_86 : f32 to vector<16x1xf32>
    %226 = arith.addf %222, %225 : vector<16x1xf32>
    %227 = math.rsqrt %226 : vector<16x1xf32>
    %228 = vector.broadcast %227 : vector<16x1xf32> to vector<16x64xf32>
    %229 = arith.mulf %224, %228 : vector<16x64xf32>
    %230 = vector.broadcast %210 : vector<1x64xf32> to vector<16x64xf32>
    %231 = arith.mulf %229, %230 : vector<16x64xf32>
    %232 = vector.broadcast %211 : vector<1x64xf32> to vector<16x64xf32>
    %233 = arith.addf %231, %232 : vector<16x64xf32>
    %cst_87 = arith.constant dense<0.000000e+00> : vector<2x64xf32>
    %234 = tpu.matmul %3, %233, %cst_87 {dimension_numbers = #tpu.dot_dimension_numbers<[1], [0], [0], [1], [0, 0, 1, 1], [], []>} : vector<2x16xf32>, vector<16x64xf32>, vector<2x64xf32> -> vector<2x64xf32>
    %c672 = arith.constant 672 : index
    %c0_88 = arith.constant 0 : index
    %235 = vector.load %arg1[%c672, %c0_88] : memref<880x192xf32, #tpu.memory_space<vmem>>, vector<64x128xf32>
    %cst_89 = arith.constant dense<0.000000e+00> : vector<2x128xf32>
    %236 = tpu.matmul %234, %235, %cst_89 {dimension_numbers = #tpu.dot_dimension_numbers<[1], [0], [0], [1], [0, 0, 1, 1], [], []>} : vector<2x64xf32>, vector<64x128xf32>, vector<2x128xf32> -> vector<2x128xf32>
    %c17 = arith.constant 17 : index
    %c0_90 = arith.constant 0 : index
    %237 = vector.load %arg2[%c17, %c0_90] : memref<18x192xf32, #tpu.memory_space<vmem>>, vector<1x128xf32>
    %238 = vector.broadcast %237 : vector<1x128xf32> to vector<2x128xf32>
    %239 = arith.addf %236, %238 : vector<2x128xf32>
    %cst_91 = arith.constant dense<0xFF800000> : vector<2xf32>
    %240 = vector.multi_reduction <maximumf>, %239, %cst_91 [1] : vector<2x128xf32> to vector<2xf32>
    %241 = vector.shape_cast %240 : vector<2xf32> to vector<2x1xf32>
    %242 = vector.broadcast %241 : vector<2x1xf32> to vector<2x128xf32>
    %243 = arith.subf %239, %242 : vector<2x128xf32>
    %244 = math.exp %243 : vector<2x128xf32>
    %cst_92 = arith.constant dense<0.000000e+00> : vector<2xf32>
    %245 = vector.multi_reduction <add>, %244, %cst_92 [1] : vector<2x128xf32> to vector<2xf32>
    %246 = vector.shape_cast %245 : vector<2xf32> to vector<2x1xf32>
    %247 = vector.broadcast %246 : vector<2x1xf32> to vector<2x128xf32>
    %248 = arith.divf %244, %247 : vector<2x128xf32>
    %c0_93 = arith.constant 0 : index
    %c0_94 = arith.constant 0 : index
    %249 = vector.load %arg3[%c0_93, %c0_94] : memref<2x128xf32, #tpu.memory_space<vmem>>, vector<2x128xf32>
    tpu.vector_store %arg3[%c0_93, %c0_94], %248 {strides = array<i32>} : memref<2x128xf32, #tpu.memory_space<vmem>>, vector<2x128xf32>,
    return
  }
}

</mosaic_0001>

<llo_original>
// kernel: transformer_prediction.1
$region0: #{transformer_prediction.1}
  #allocation0 [shape = 'u32[]', space=smem, size = 0x4, offset = 0x4, fixed_abs, tag = 'smem constant byte address 0x4 - core index']
  #allocation1 [shape = 'u32[72,128]{1,0:T(1,128)}', space=vmem, size = 0x9000, scoped, tag = 'internal scratch']
  %s0 = inlined_call_operand.vmem [shape: f32[16,32], index: 0, kind: input, shape index: {}]
  %s1 = inlined_call_operand.vmem [shape: f32[880,192], index: 1, kind: input, shape index: {}]
  %s2 = inlined_call_operand.vmem [shape: f32[18,192], index: 2, kind: input, shape index: {}]
  %s3 = inlined_call_operand.hbm [shape: f32[2,128], index: 3, kind: output, shape index: {}]
  %s4 = sld [smem:[#allocation0]]
  $region22: #{transformer_prediction.1} parent=0
    _
  %s6 = ssub.s32 1, %s4
  %s7 = scalar_select 0, %s6, %s4
  $region1: #{transformer_prediction.1} parent=0
    #allocation2 [shape = 'u8[1024]{0}', space=vmem, size = 0x400, scoped, tag = 'output window, operand 0, single buffered']
    #allocation3 [shape = 's32[1]{0}', space=sflag, size = 0x4, scoped, tag = 'scoped memory for transformer_prediction.1']
    %8 = vsyncpa [#allocation3], 0
    // Predicated region
    $region2: #{transformer_prediction.1} parent=1 // pred_check
      _
    $region3: #{transformer_prediction.1} parent=1 // pred_check_branch
      %10 = sbr.rel (0) target = $region5
    $region4: #{transformer_prediction.1} parent=1 // pred_region
      _
    $region5: #{transformer_prediction.1} parent=1 // pred_fallthru
      _
    // Predicated region
    $region6: #{transformer_prediction.1} parent=1 // pred_check
      _
    $region7: #{transformer_prediction.1} parent=1 // pred_check_branch
      %12 = sbr.rel (0) target = $region9
    $region8: #{transformer_prediction.1} parent=1 // pred_region
      _
    $region9: #{transformer_prediction.1} parent=1 // pred_fallthru
      _
    // Predicated region
    $region10: #{transformer_prediction.1} parent=1 // pred_check
      _
    $region11: #{transformer_prediction.1} parent=1 // pred_check_branch
      %14 = sbr.rel (0) target = $region13
    $region12: #{transformer_prediction.1} parent=1 // pred_region
      _
    $region13: #{transformer_prediction.1} parent=1 // pred_fallthru
      _
    %v15 = vld [vmem:[%s1 + $0x5c0] sm:$0xff]
    %v16 = vld [vmem:[%s1 + $0x5d0] sm:$0xff]
    %v17 = vld [vmem:[%s1 + $0x5e0] sm:$0xff]
    %v18 = vld [vmem:[%s1 + $0x5f0] sm:$0xff]
    %v19 = vld [vmem:[%s1 + $0x600] sm:$0xff]
    %v20 = vld [vmem:[%s1 + $0x610] sm:$0xff]
    %v21 = vld [vmem:[%s1 + $0x620] sm:$0xff]
    %v22 = vld [vmem:[%s1 + $0x630] sm:$0xff]
    %v23 = vld [vmem:[%s1 + $0x640] sm:$0xff]
    %v24 = vld [vmem:[%s1 + $0x650] sm:$0xff]
    %v25 = vld [vmem:[%s1 + $0x660] sm:$0xff]
    %v26 = vld [vmem:[%s1 + $0x670] sm:$0xff]
    %v27 = vld [vmem:[%s1 + $0x680] sm:$0xff]
    %v28 = vld [vmem:[%s1 + $0x690] sm:$0xff]
    %v29 = vld [vmem:[%s1 + $0x6a0] sm:$0xff]
    %v30 = vld [vmem:[%s1 + $0x6b0] sm:$0xff]
    %v31 = vld [vmem:[%s1 + $0x6c0] sm:$0xff]
    %v32 = vld [vmem:[%s1 + $0x6d0] sm:$0x3]
    %v33 = vld [vmem:[%s0] sm:$0xff]
    %v34 = vld [vmem:[%s0 + $0x8] sm:$0xff]
    %v35 = vld [vmem:[%s1] sm:$0xff]
    %v36 = vld [vmem:[%s1 + $0x10] sm:$0xff]
    %v37 = vld [vmem:[%s1 + $0x20] sm:$0xff]
    %v38 = vld [vmem:[%s1 + $0x30] sm:$0xff]
    %v39 = vld [vmem:[%s2] ss:$0 sm:$0xff]
    %vm40 = vcmask 261120
    %v42 = vsel %vm40, %v33, 0
    %v45 = vsel %vm40, %v34, 0
    %47 = vmatpush.msra.mxu0 0.0
    %48 = vmatpush.msra.mxu0 0.0
    %49 = vmatpush.msra.mxu0 0.0
    %50 = vmatpush.msra.mxu0 0.0
    %51 = vmatpush.msra.mxu0 0.0
    %52 = vmatpush.msra.mxu0 0.0
    %53 = vmatpush.msra.mxu0 0.0
    %54 = vmatpush.msra.mxu0 0.0
    %55 = vmatpush.msra.mxu0 0.0
    %56 = vmatpush.msra.mxu0 0.0
    %57 = vmatpush.msra.mxu0 0.0
    %58 = vmatpush.msra.mxu0 0.0
    %59 = vmatpush.msra.mxu0 %v38
    %60 = vmatpush.msra.mxu0 %v37
    %61 = vmatpush.msra.mxu0 %v36
    %62 = vmatpush.msra.mxu0 %v35
    %63 = vmatmul.f32.gmra.mxu0 %v42
    %v64 = vpop.f32.mrf.mxu0
    %v65 = vadd.f32 %v39, %v64
    %66 = vmatmul.f32.gmra.mxu0 %v45
    %v67 = vpop.f32.mrf.mxu0
    %v68 = vadd.f32 %v39, %v67
    %69 = vdwg.mxu0
    %v70 = vld [vmem:[%s1 + $0x40] sm:$0xff]
    %v71 = vld [vmem:[%s1 + $0x48] sm:$0xff]
    %v72 = vld [vmem:[%s1 + $0x50] sm:$0xff]
    %v73 = vld [vmem:[%s1 + $0x58] sm:$0xff]
    %v74 = vld [vmem:[%s1 + $0x60] sm:$0xff]
    %v75 = vld [vmem:[%s1 + $0x68] sm:$0xff]
    %v76 = vld [vmem:[%s1 + $0x70] sm:$0xff]
    %v77 = vld [vmem:[%s1 + $0x78] sm:$0xff]
    %v78 = vld [vmem:[%s1 + $0x80] sm:$0xff]
    %v79 = vld [vmem:[%s1 + $0x88] sm:$0xff]
    %v80 = vld [vmem:[%s1 + $0x90] sm:$0xff]
    %v81 = vld [vmem:[%s1 + $0x98] sm:$0xff]
    %v82 = vld [vmem:[%s1 + $0xa0] sm:$0xff]
    %v83 = vld [vmem:[%s1 + $0xa8] sm:$0xff]
    %v84 = vld [vmem:[%s1 + $0xb0] sm:$0xff]
    %v85 = vld [vmem:[%s1 + $0xb8] sm:$0xff]
    %s86 = scalar_lea.vmem %s2, 1
    %v87 = vld [vmem:[%s86] ss:$8 sm:$0x3]
    %v89 = vperm.slane %v87, 0
    %v90 = vperm.slane %v87, 1
    %vm93 = vcmask 523264
    %v95 = vsel %vm93, %v65, 0
    %v98 = vsel %vm93, %v68, 0
    %100 = vmatpush.msra.mxu0 0.0
    %101 = vmatpush.msra.mxu0 0.0
    %102 = vmatpush.msra.mxu0 0.0
    %103 = vmatpush.msra.mxu0 0.0
    %104 = vmatpush.msra.mxu0 0.0
    %105 = vmatpush.msra.mxu0 0.0
    %106 = vmatpush.msra.mxu0 0.0
    %107 = vmatpush.msra.mxu0 0.0
    %108 = vmatpush.msra.mxu0 %v84
    %109 = vmatpush.msra.mxu0 %v82
    %110 = vmatpush.msra.mxu0 %v80
    %111 = vmatpush.msra.mxu0 %v78
    %112 = vmatpush.msra.mxu0 %v76
    %113 = vmatpush.msra.mxu0 %v74
    %114 = vmatpush.msra.mxu0 %v72
    %115 = vmatpush.msra.mxu0 %v70
    %116 = vmatmul.f32.gmra.mxu0 %v95
    %v117 = vpop.f32.mrf.mxu0
    %v118 = vadd.f32 %v89, %v117
    %119 = vmatmul.f32.gmra.mxu0 %v98
    %v120 = vpop.f32.mrf.mxu0
    %v121 = vadd.f32 %v89, %v120
    %122 = vdwg.mxu0
    %123 = vmatpush.msra.mxu0 0.0
    %124 = vmatpush.msra.mxu0 0.0
    %125 = vmatpush.msra.mxu0 0.0
    %126 = vmatpush.msra.mxu0 0.0
    %127 = vmatpush.msra.mxu0 0.0
    %128 = vmatpush.msra.mxu0 0.0
    %129 = vmatpush.msra.mxu0 0.0
    %130 = vmatpush.msra.mxu0 0.0
    %131 = vmatpush.msra.mxu0 %v85
    %132 = vmatpush.msra.mxu0 %v83
    %133 = vmatpush.msra.mxu0 %v81
    %134 = vmatpush.msra.mxu0 %v79
    %135 = vmatpush.msra.mxu0 %v77
    %136 = vmatpush.msra.mxu0 %v75
    %137 = vmatpush.msra.mxu0 %v73
    %138 = vmatpush.msra.mxu0 %v71
    %139 = vmatmul.f32.gmra.mxu0 %v95
    %v140 = vpop.f32.mrf.mxu0
    %v141 = vadd.f32 %v90, %v140
    %142 = vmatmul.f32.gmra.mxu0 %v98
    %v143 = vpop.f32.mrf.mxu0
    %v144 = vadd.f32 %v90, %v143
    %145 = vdwg.mxu0
    %147 = vrot.lane.b32.xlu0 %v118, 64
    %v148 = vpop.permute.xlu0 %147
    %150 = vxpose.xlu0.b32.start [1/16] %v148, 128
    %151 = vxpose.xlu0.b32.cont [2/16] 0.0, 128
    %152 = vxpose.xlu0.b32.cont [3/16] 0.0, 128
    %153 = vxpose.xlu0.b32.cont [4/16] 0.0, 128
    %154 = vxpose.xlu0.b32.cont [5/16] 0.0, 128
    %155 = vxpose.xlu0.b32.cont [6/16] 0.0, 128
    %156 = vxpose.xlu0.b32.cont [7/16] 0.0, 128
    %157 = vxpose.xlu0.b32.cont [8/16] 0.0, 128
    %158 = vxpose.xlu0.b32.cont [9/16] 0.0, 128
    %159 = vxpose.xlu0.b32.cont [10/16] 0.0, 128
    %160 = vxpose.xlu0.b32.cont [11/16] 0.0, 128
    %161 = vxpose.xlu0.b32.cont [12/16] 0.0, 128
    %162 = vxpose.xlu0.b32.cont [13/16] 0.0, 128
    %163 = vxpose.xlu0.b32.cont [14/16] 0.0, 128
    %164 = vxpose.xlu0.b32.cont [15/16] 0.0, 128
    %165 = vxpose.xlu0.b32.end [16/16] 0.0, 128
    %v166 = vpop.trf.xlu0
    %v167 = vpop.trf.xlu0
    %v168 = vpop.trf.xlu0
    %v169 = vpop.trf.xlu0
    %v170 = vpop.trf.xlu0
    %v171 = vpop.trf.xlu0
    %v172 = vpop.trf.xlu0
    %v173 = vpop.trf.xlu0
    %v174 = vpop.trf.xlu0
    %v175 = vpop.trf.xlu0
    %v176 = vpop.trf.xlu0
    %v177 = vpop.trf.xlu0
    %v178 = vpop.trf.xlu0
    %v179 = vpop.trf.xlu0
    %v180 = vpop.trf.xlu0
    %v181 = vpop.trf.xlu0
    %vm182 = vcmask 64512
    %v184 = vsel %vm182, %v166, 0
    %v187 = vsel %vm182, %v167, 0
    %v190 = vsel %vm182, %v168, 0
    %v193 = vsel %vm182, %v169, 0
    %v196 = vsel %vm182, %v170, 0
    %v199 = vsel %vm182, %v171, 0
    %v202 = vsel %vm182, %v172, 0
    %v205 = vsel %vm182, %v173, 0
    %207 = vmatpush.msra.mxu0 0.0
    %208 = vmatpush.msra.mxu0 0.0
    %209 = vmatpush.msra.mxu0 0.0
    %210 = vmatpush.msra.mxu0 0.0
    %211 = vmatpush.msra.mxu0 0.0
    %212 = vmatpush.msra.mxu0 0.0
    %213 = vmatpush.msra.mxu0 0.0
    %214 = vmatpush.msra.mxu0 0.0
    %215 = vmatpush.msra.mxu0 0.0
    %216 = vmatpush.msra.mxu0 0.0
    %217 = vmatpush.msra.mxu0 0.0
    %218 = vmatpush.msra.mxu0 0.0
    %219 = vmatpush.msra.mxu0 0.0
    %220 = vmatpush.msra.mxu0 0.0
    %221 = vmatpush.msra.mxu0 0.0
    %222 = vmatpush.msra.mxu0 %v23
    %223 = vmatmul.f32.gmra.mxu0 %v184
    %v224 = vpop.f32.mrf.mxu0
    %v225 = vadd.f32 0.0, %v224
    %226 = vmatmul.f32.gmra.mxu0 %v187
    %v227 = vpop.f32.mrf.mxu0
    %v228 = vadd.f32 0.0, %v227
    %229 = vmatmul.f32.gmra.mxu0 %v190
    %v230 = vpop.f32.mrf.mxu0
    %v231 = vadd.f32 0.0, %v230
    %232 = vmatmul.f32.gmra.mxu0 %v193
    %v233 = vpop.f32.mrf.mxu0
    %v234 = vadd.f32 0.0, %v233
    %235 = vmatmul.f32.gmra.mxu0 %v196
    %v236 = vpop.f32.mrf.mxu0
    %v237 = vadd.f32 0.0, %v236
    %238 = vmatmul.f32.gmra.mxu0 %v199
    %v239 = vpop.f32.mrf.mxu0
    %v240 = vadd.f32 0.0, %v239
    %241 = vmatmul.f32.gmra.mxu0 %v202
    %v242 = vpop.f32.mrf.mxu0
    %v243 = vadd.f32 0.0, %v242
    %244 = vmatmul.f32.gmra.mxu0 %v205
    %v245 = vpop.f32.mrf.mxu0
    %v246 = vadd.f32 0.0, %v245
    %247 = vdwg.mxu0
    %v248 = vmul.f32 %v225, %v15
    %v249 = vmul.f32 %v228, %v16
    %v250 = vmul.f32 %v231, %v17
    %v251 = vmul.f32 %v234, %v18
    %v252 = vmul.f32 %v237, %v19
    %v253 = vmul.f32 %v240, %v20
    %v254 = vmul.f32 %v243, %v21
    %v255 = vmul.f32 %v246, %v22
    %v257 = vsel %vm182, %v24, 0
    %v260 = vsel %vm182, %v25, 0
    %v263 = vsel %vm182, %v26, 0
    %v266 = vsel %vm182, %v27, 0
    %v269 = vsel %vm182, %v28, 0
    %v272 = vsel %vm182, %v29, 0
    %v275 = vsel %vm182, %v30, 0
    %v278 = vsel %vm182, %v31, 0
    %280 = vmatpush.msra.mxu0 0.0
    %281 = vmatpush.msra.mxu0 0.0
    %282 = vmatpush.msra.mxu0 0.0
    %283 = vmatpush.msra.mxu0 0.0
    %284 = vmatpush.msra.mxu0 0.0
    %285 = vmatpush.msra.mxu0 0.0
    %286 = vmatpush.msra.mxu0 0.0
    %287 = vmatpush.msra.mxu0 0.0
    %288 = vmatpush.msra.mxu0 0.0
    %289 = vmatpush.msra.mxu0 0.0
    %290 = vmatpush.msra.mxu0 0.0
    %291 = vmatpush.msra.mxu0 0.0
    %292 = vmatpush.msra.mxu0 0.0
    %293 = vmatpush.msra.mxu0 0.0
    %294 = vmatpush.msra.mxu0 0.0
    %295 = vmatpush.msra.mxu0 %v141
    %296 = vmatmul.f32.gmra.mxu0 %v257
    %v297 = vpop.f32.mrf.mxu0
    %v298 = vadd.f32 0.0, %v297
    %299 = vmatmul.f32.gmra.mxu0 %v260
    %v300 = vpop.f32.mrf.mxu0
    %v301 = vadd.f32 0.0, %v300
    %302 = vmatmul.f32.gmra.mxu0 %v263
    %v303 = vpop.f32.mrf.mxu0
    %v304 = vadd.f32 0.0, %v303
    %305 = vmatmul.f32.gmra.mxu0 %v266
    %v306 = vpop.f32.mrf.mxu0
    %v307 = vadd.f32 0.0, %v306
    %308 = vmatmul.f32.gmra.mxu0 %v269
    %v309 = vpop.f32.mrf.mxu0
    %v310 = vadd.f32 0.0, %v309
    %311 = vmatmul.f32.gmra.mxu0 %v272
    %v312 = vpop.f32.mrf.mxu0
    %v313 = vadd.f32 0.0, %v312
    %314 = vmatmul.f32.gmra.mxu0 %v275
    %v315 = vpop.f32.mrf.mxu0
    %v316 = vadd.f32 0.0, %v315
    %317 = vmatmul.f32.gmra.mxu0 %v278
    %v318 = vpop.f32.mrf.mxu0
    %v319 = vadd.f32 0.0, %v318
    %320 = vdwg.mxu0
    %v321 = vmul.f32 %v298, %v15
    %v322 = vmul.f32 %v301, %v16
    %v323 = vmul.f32 %v304, %v17
    %v324 = vmul.f32 %v307, %v18
    %v325 = vmul.f32 %v310, %v19
    %v326 = vmul.f32 %v313, %v20
    %v327 = vmul.f32 %v316, %v21
    %v328 = vmul.f32 %v319, %v22
    %v329 = vsel %vm93, %v118, 0
    %331 = vmatpush.msra.mxu0 0.0
    %332 = vmatpush.msra.mxu0 0.0
    %333 = vmatpush.msra.mxu0 0.0
    %334 = vmatpush.msra.mxu0 0.0
    %335 = vmatpush.msra.mxu0 0.0
    %336 = vmatpush.msra.mxu0 0.0
    %337 = vmatpush.msra.mxu0 0.0
    %338 = vmatpush.msra.mxu0 0.0
    %339 = vmatpush.msra.mxu0 %v255
    %340 = vmatpush.msra.mxu0 %v254
    %341 = vmatpush.msra.mxu0 %v253
    %342 = vmatpush.msra.mxu0 %v252
    %343 = vmatpush.msra.mxu0 %v251
    %344 = vmatpush.msra.mxu0 %v250
    %345 = vmatpush.msra.mxu0 %v249
    %346 = vmatpush.msra.mxu0 %v248
    %347 = vmatmul.f32.gmra.mxu0 %v329
    %v348 = vpop.f32.mrf.mxu0
    %v349 = vadd.f32 0.0, %v348
    %350 = vdwg.mxu0
    %v351 = vsel %vm93, %v349, -inf
    %352 = vmax.xlane.f32.xlu0 %v351
    %v353 = vpop.xlane.xlu0 %352
    %v354 = vsub.f32 %v349, %v353
    %v355 = vmul.f32 %v354, 1.442695
    %v356 = vpow.pop %v355
    %v358 = vsel %vm93, %v356, 0
    %360 = vmatpush.msra.mxu0 0.0
    %361 = vmatpush.msra.mxu0 0.0
    %362 = vmatpush.msra.mxu0 0.0
    %363 = vmatpush.msra.mxu0 0.0
    %364 = vmatpush.msra.mxu0 0.0
    %365 = vmatpush.msra.mxu0 0.0
    %366 = vmatpush.msra.mxu0 0.0
    %367 = vmatpush.msra.mxu0 0.0
    %368 = vmatpush.msra.mxu0 %v22
    %369 = vmatpush.msra.mxu0 %v21
    %370 = vmatpush.msra.mxu0 %v20
    %371 = vmatpush.msra.mxu0 %v19
    %372 = vmatpush.msra.mxu0 %v18
    %373 = vmatpush.msra.mxu0 %v17
    %374 = vmatpush.msra.mxu0 %v16
    %375 = vmatpush.msra.mxu0 %v15
    %376 = vmatmul.f32.gmra.mxu0 %v358
    %v377 = vpop.f32.mrf.mxu0
    %v378 = vadd.f32 0.0, %v377
    %379 = vdwg.mxu0
    %v380 = vrcp.pop %v378
    %v381 = vmul.f32 %v356, %v380
    %v383 = vsel %vm93, %v381, 0
    %385 = vmatpush.msra.mxu0 0.0
    %386 = vmatpush.msra.mxu0 0.0
    %387 = vmatpush.msra.mxu0 0.0
    %388 = vmatpush.msra.mxu0 0.0
    %389 = vmatpush.msra.mxu0 0.0
    %390 = vmatpush.msra.mxu0 0.0
    %391 = vmatpush.msra.mxu0 0.0
    %392 = vmatpush.msra.mxu0 0.0
    %393 = vmatpush.msra.mxu0 %v328
    %394 = vmatpush.msra.mxu0 %v327
    %395 = vmatpush.msra.mxu0 %v326
    %396 = vmatpush.msra.mxu0 %v325
    %397 = vmatpush.msra.mxu0 %v324
    %398 = vmatpush.msra.mxu0 %v323
    %399 = vmatpush.msra.mxu0 %v322
    %400 = vmatpush.msra.mxu0 %v321
    %401 = vmatmul.f32.gmra.mxu0 %v383
    %v402 = vpop.f32.mrf.mxu0
    %v403 = vadd.f32 0.0, %v402
    %404 = vdwg.mxu0
    %406 = vrot.lane.b32.xlu0 %v121, 64
    %v407 = vpop.permute.xlu0 %406
    %409 = vxpose.xlu0.b32.start [1/16] %v407, 128
    %410 = vxpose.xlu0.b32.cont [2/16] 0.0, 128
    %411 = vxpose.xlu0.b32.cont [3/16] 0.0, 128
    %412 = vxpose.xlu0.b32.cont [4/16] 0.0, 128
    %413 = vxpose.xlu0.b32.cont [5/16] 0.0, 128
    %414 = vxpose.xlu0.b32.cont [6/16] 0.0, 128
    %415 = vxpose.xlu0.b32.cont [7/16] 0.0, 128
    %416 = vxpose.xlu0.b32.cont [8/16] 0.0, 128
    %417 = vxpose.xlu0.b32.cont [9/16] 0.0, 128
    %418 = vxpose.xlu0.b32.cont [10/16] 0.0, 128
    %419 = vxpose.xlu0.b32.cont [11/16] 0.0, 128
    %420 = vxpose.xlu0.b32.cont [12/16] 0.0, 128
    %421 = vxpose.xlu0.b32.cont [13/16] 0.0, 128
    %422 = vxpose.xlu0.b32.cont [14/16] 0.0, 128
    %423 = vxpose.xlu0.b32.cont [15/16] 0.0, 128
    %424 = vxpose.xlu0.b32.end [16/16] 0.0, 128
    %v425 = vpop.trf.xlu0
    %v426 = vpop.trf.xlu0
    %v427 = vpop.trf.xlu0
    %v428 = vpop.trf.xlu0
    %v429 = vpop.trf.xlu0
    %v430 = vpop.trf.xlu0
    %v431 = vpop.trf.xlu0
    %v432 = vpop.trf.xlu0
    %v433 = vpop.trf.xlu0
    %v434 = vpop.trf.xlu0
    %v435 = vpop.trf.xlu0
    %v436 = vpop.trf.xlu0
    %v437 = vpop.trf.xlu0
    %v438 = vpop.trf.xlu0
    %v439 = vpop.trf.xlu0
    %v440 = vpop.trf.xlu0
    %v442 = vsel %vm182, %v425, 0
    %v445 = vsel %vm182, %v426, 0
    %v448 = vsel %vm182, %v427, 0
    %v451 = vsel %vm182, %v428, 0
    %v454 = vsel %vm182, %v429, 0
    %v457 = vsel %vm182, %v430, 0
    %v460 = vsel %vm182, %v431, 0
    %v463 = vsel %vm182, %v432, 0
    %465 = vmatpush.msra.mxu0 0.0
    %466 = vmatpush.msra.mxu0 0.0
    %467 = vmatpush.msra.mxu0 0.0
    %468 = vmatpush.msra.mxu0 0.0
    %469 = vmatpush.msra.mxu0 0.0
    %470 = vmatpush.msra.mxu0 0.0
    %471 = vmatpush.msra.mxu0 0.0
    %472 = vmatpush.msra.mxu0 0.0
    %473 = vmatpush.msra.mxu0 0.0
    %474 = vmatpush.msra.mxu0 0.0
    %475 = vmatpush.msra.mxu0 0.0
    %476 = vmatpush.msra.mxu0 0.0
    %477 = vmatpush.msra.mxu0 0.0
    %478 = vmatpush.msra.mxu0 0.0
    %479 = vmatpush.msra.mxu0 0.0
    %480 = vmatpush.msra.mxu0 %v23
    %481 = vmatmul.f32.gmra.mxu0 %v442
    %v482 = vpop.f32.mrf.mxu0
    %v483 = vadd.f32 0.0, %v482
    %484 = vmatmul.f32.gmra.mxu0 %v445
    %v485 = vpop.f32.mrf.mxu0
    %v486 = vadd.f32 0.0, %v485
    %487 = vmatmul.f32.gmra.mxu0 %v448
    %v488 = vpop.f32.mrf.mxu0
    %v489 = vadd.f32 0.0, %v488
    %490 = vmatmul.f32.gmra.mxu0 %v451
    %v491 = vpop.f32.mrf.mxu0
    %v492 = vadd.f32 0.0, %v491
    %493 = vmatmul.f32.gmra.mxu0 %v454
    %v494 = vpop.f32.mrf.mxu0
    %v495 = vadd.f32 0.0, %v494
    %496 = vmatmul.f32.gmra.mxu0 %v457
    %v497 = vpop.f32.mrf.mxu0
    %v498 = vadd.f32 0.0, %v497
    %499 = vmatmul.f32.gmra.mxu0 %v460
    %v500 = vpop.f32.mrf.mxu0
    %v501 = vadd.f32 0.0, %v500
    %502 = vmatmul.f32.gmra.mxu0 %v463
    %v503 = vpop.f32.mrf.mxu0
    %v504 = vadd.f32 0.0, %v503
    %505 = vdwg.mxu0
    %v506 = vmul.f32 %v483, %v15
    %v507 = vmul.f32 %v486, %v16
    %v508 = vmul.f32 %v489, %v17
    %v509 = vmul.f32 %v492, %v18
    %v510 = vmul.f32 %v495, %v19
    %v511 = vmul.f32 %v498, %v20
    %v512 = vmul.f32 %v501, %v21
    %v513 = vmul.f32 %v504, %v22
    %514 = vmatpush.msra.mxu0 0.0
    %515 = vmatpush.msra.mxu0 0.0
    %516 = vmatpush.msra.mxu0 0.0
    %517 = vmatpush.msra.mxu0 0.0
    %518 = vmatpush.msra.mxu0 0.0
    %519 = vmatpush.msra.mxu0 0.0
    %520 = vmatpush.msra.mxu0 0.0
    %521 = vmatpush.msra.mxu0 0.0
    %522 = vmatpush.msra.mxu0 0.0
    %523 = vmatpush.msra.mxu0 0.0
    %524 = vmatpush.msra.mxu0 0.0
    %525 = vmatpush.msra.mxu0 0.0
    %526 = vmatpush.msra.mxu0 0.0
    %527 = vmatpush.msra.mxu0 0.0
    %528 = vmatpush.msra.mxu0 0.0
    %529 = vmatpush.msra.mxu0 %v144
    %530 = vmatmul.f32.gmra.mxu0 %v257
    %v531 = vpop.f32.mrf.mxu0
    %v532 = vadd.f32 0.0, %v531
    %533 = vmatmul.f32.gmra.mxu0 %v260
    %v534 = vpop.f32.mrf.mxu0
    %v535 = vadd.f32 0.0, %v534
    %536 = vmatmul.f32.gmra.mxu0 %v263
    %v537 = vpop.f32.mrf.mxu0
    %v538 = vadd.f32 0.0, %v537
    %539 = vmatmul.f32.gmra.mxu0 %v266
    %v540 = vpop.f32.mrf.mxu0
    %v541 = vadd.f32 0.0, %v540
    %542 = vmatmul.f32.gmra.mxu0 %v269
    %v543 = vpop.f32.mrf.mxu0
    %v544 = vadd.f32 0.0, %v543
    %545 = vmatmul.f32.gmra.mxu0 %v272
    %v546 = vpop.f32.mrf.mxu0
    %v547 = vadd.f32 0.0, %v546
    %548 = vmatmul.f32.gmra.mxu0 %v275
    %v549 = vpop.f32.mrf.mxu0
    %v550 = vadd.f32 0.0, %v549
    %551 = vmatmul.f32.gmra.mxu0 %v278
    %v552 = vpop.f32.mrf.mxu0
    %v553 = vadd.f32 0.0, %v552
    %554 = vdwg.mxu0
    %v555 = vmul.f32 %v532, %v15
    %v556 = vmul.f32 %v535, %v16
    %v557 = vmul.f32 %v538, %v17
    %v558 = vmul.f32 %v541, %v18
    %v559 = vmul.f32 %v544, %v19
    %v560 = vmul.f32 %v547, %v20
    %v561 = vmul.f32 %v550, %v21
    %v562 = vmul.f32 %v553, %v22
    %v563 = vsel %vm93, %v121, 0
    %565 = vmatpush.msra.mxu0 0.0
    %566 = vmatpush.msra.mxu0 0.0
    %567 = vmatpush.msra.mxu0 0.0
    %568 = vmatpush.msra.mxu0 0.0
    %569 = vmatpush.msra.mxu0 0.0
    %570 = vmatpush.msra.mxu0 0.0
    %571 = vmatpush.msra.mxu0 0.0
    %572 = vmatpush.msra.mxu0 0.0
    %573 = vmatpush.msra.mxu0 %v513
    %574 = vmatpush.msra.mxu0 %v512
    %575 = vmatpush.msra.mxu0 %v511
    %576 = vmatpush.msra.mxu0 %v510
    %577 = vmatpush.msra.mxu0 %v509
    %578 = vmatpush.msra.mxu0 %v508
    %579 = vmatpush.msra.mxu0 %v507
    %580 = vmatpush.msra.mxu0 %v506
    %581 = vmatmul.f32.gmra.mxu0 %v563
    %v582 = vpop.f32.mrf.mxu0
    %v583 = vadd.f32 0.0, %v582
    %584 = vdwg.mxu0
    %v585 = vsel %vm93, %v583, -inf
    %586 = vmax.xlane.f32.xlu0 %v585
    %v587 = vpop.xlane.xlu0 %586
    %v588 = vsub.f32 %v583, %v587
    %v589 = vmul.f32 %v588, 1.442695
    %v590 = vpow.pop %v589
    %v592 = vsel %vm93, %v590, 0
    %594 = vmatpush.msra.mxu0 0.0
    %595 = vmatpush.msra.mxu0 0.0
    %596 = vmatpush.msra.mxu0 0.0
    %597 = vmatpush.msra.mxu0 0.0
    %598 = vmatpush.msra.mxu0 0.0
    %599 = vmatpush.msra.mxu0 0.0
    %600 = vmatpush.msra.mxu0 0.0
    %601 = vmatpush.msra.mxu0 0.0
    %602 = vmatpush.msra.mxu0 %v22
    %603 = vmatpush.msra.mxu0 %v21
    %604 = vmatpush.msra.mxu0 %v20
    %605 = vmatpush.msra.mxu0 %v19
    %606 = vmatpush.msra.mxu0 %v18
    %607 = vmatpush.msra.mxu0 %v17
    %608 = vmatpush.msra.mxu0 %v16
    %609 = vmatpush.msra.mxu0 %v15
    %610 = vmatmul.f32.gmra.mxu0 %v592
    %v611 = vpop.f32.mrf.mxu0
    %v612 = vadd.f32 0.0, %v611
    %613 = vdwg.mxu0
    %v614 = vrcp.pop %v612
    %v615 = vmul.f32 %v590, %v614
    %v617 = vsel %vm93, %v615, 0
    %619 = vmatpush.msra.mxu0 0.0
    %620 = vmatpush.msra.mxu0 0.0
    %621 = vmatpush.msra.mxu0 0.0
    %622 = vmatpush.msra.mxu0 0.0
    %623 = vmatpush.msra.mxu0 0.0
    %624 = vmatpush.msra.mxu0 0.0
    %625 = vmatpush.msra.mxu0 0.0
    %626 = vmatpush.msra.mxu0 0.0
    %627 = vmatpush.msra.mxu0 %v562
    %628 = vmatpush.msra.mxu0 %v561
    %629 = vmatpush.msra.mxu0 %v560
    %630 = vmatpush.msra.mxu0 %v559
    %631 = vmatpush.msra.mxu0 %v558
    %632 = vmatpush.msra.mxu0 %v557
    %633 = vmatpush.msra.mxu0 %v556
    %634 = vmatpush.msra.mxu0 %v555
    %635 = vmatmul.f32.gmra.mxu0 %v617
    %v636 = vpop.f32.mrf.mxu0
    %v637 = vadd.f32 0.0, %v636
    %638 = vdwg.mxu0
    %v639 = vld [vmem:[%s1 + $0xc0] sm:$0xff]
    %v640 = vld [vmem:[%s1 + $0xd0] sm:$0xff]
    %v641 = vld [vmem:[%s1 + $0xe0] sm:$0xff]
    %v642 = vld [vmem:[%s1 + $0xf0] sm:$0xff]
    %v643 = vld [vmem:[%s1 + $0x100] sm:$0xff]
    %v644 = vld [vmem:[%s1 + $0x110] sm:$0xff]
    %v645 = vld [vmem:[%s1 + $0x120] sm:$0xff]
    %v646 = vld [vmem:[%s1 + $0x130] sm:$0xff]
    %v647 = vld [vmem:[%s2 + $0x2] ss:$0 sm:$0xff]
    %v649 = vsel %vm93, %v403, 0
    %v652 = vsel %vm93, %v637, 0
    %654 = vmatpush.msra.mxu0 0.0
    %655 = vmatpush.msra.mxu0 0.0
    %656 = vmatpush.msra.mxu0 0.0
    %657 = vmatpush.msra.mxu0 0.0
    %658 = vmatpush.msra.mxu0 0.0
    %659 = vmatpush.msra.mxu0 0.0
    %660 = vmatpush.msra.mxu0 0.0
    %661 = vmatpush.msra.mxu0 0.0
    %662 = vmatpush.msra.mxu0 %v646
    %663 = vmatpush.msra.mxu0 %v645
    %664 = vmatpush.msra.mxu0 %v644
    %665 = vmatpush.msra.mxu0 %v643
    %666 = vmatpush.msra.mxu0 %v642
    %667 = vmatpush.msra.mxu0 %v641
    %668 = vmatpush.msra.mxu0 %v640
    %669 = vmatpush.msra.mxu0 %v639
    %670 = vmatmul.f32.gmra.mxu0 %v649
    %v671 = vpop.f32.mrf.mxu0
    %v672 = vadd.f32 %v647, %v671
    %673 = vmatmul.f32.gmra.mxu0 %v652
    %v674 = vpop.f32.mrf.mxu0
    %v675 = vadd.f32 %v647, %v674
    %676 = vdwg.mxu0
    %v677 = vadd.f32 %v65, %v672
    %v678 = vadd.f32 %v68, %v675
    %v679 = vld [vmem:[%s2 + $0x5] ss:$0 sm:$0xff]
    %v680 = vld [vmem:[%s2 + $0x6] ss:$0 sm:$0xff]
    %v681 = vsel %vm93, %v677, 0.0
    %682 = vadd.xlane.f32.xlu0 %v681
    %v683 = vpop.xlane.xlu0 %682
    %v684 = vsel %vm93, %v678, 0.0
    %685 = vadd.xlane.f32.xlu0 %v684
    %v686 = vpop.xlane.xlu0 %685
    %v687 = vrcp.pop 64.0
    %v688 = vmul.f32 64.0, %v687
    %v689 = vsub.f32 1.0, %v688
    %v690 = vmul.f32 %v687, %v689
    %v691 = vadd.f32 %v687, %v690
    %vm692 = vweird.f32 %v687
    %v693 = vsel %vm692, %v687, %v691
    %v694 = vmul.f32 %v683, %v693
    %v695 = vmul.f32 %v686, %v693
    %v696 = vsub.f32 %v677, %v694
    %v697 = vsub.f32 %v678, %v695
    %v698 = vmul.f32 %v696, %v696
    %v699 = vmul.f32 %v697, %v697
    %v700 = vsel %vm93, %v698, 0.0
    %701 = vadd.xlane.f32.xlu0 %v700
    %v702 = vpop.xlane.xlu0 %701
    %v703 = vsel %vm93, %v699, 0.0
    %704 = vadd.xlane.f32.xlu0 %v703
    %v705 = vpop.xlane.xlu0 %704
    %v706 = vmul.f32 %v702, %v693
    %v707 = vmul.f32 %v705, %v693
    %v708 = vadd.f32 %v706, 1e-05
    %v709 = vadd.f32 %v707, 1e-05
    %v710 = vrsqrt.pop %v708
    %v711 = vmul.f32 %v710, %v708
    %v712 = vmul.f32 %v711, %v710
    %v713 = vmul.f32 0.5, %v712
    %v714 = vsub.f32 1.5, %v713
    %v715 = vmul.f32 %v710, %v714
    %vm716 = vweird.f32 %v708
    %vm717 = vweird.f32 %v710
    %vm718 = vmor %vm716, %vm717
    %v719 = vsel %vm718, %v710, %v715
    %v720 = vrsqrt.pop %v709
    %v721 = vmul.f32 %v720, %v709
    %v722 = vmul.f32 %v721, %v720
    %v723 = vmul.f32 0.5, %v722
    %v724 = vsub.f32 1.5, %v723
    %v725 = vmul.f32 %v720, %v724
    %vm726 = vweird.f32 %v709
    %vm727 = vweird.f32 %v720
    %vm728 = vmor %vm726, %vm727
    %v729 = vsel %vm728, %v720, %v725
    %v730 = vmul.f32 %v696, %v719
    %v731 = vmul.f32 %v697, %v729
    %v732 = vmul.f32 %v730, %v679
    %v733 = vmul.f32 %v731, %v679
    %v734 = vadd.f32 %v732, %v680
    %v735 = vadd.f32 %v733, %v680
    %v736 = vld [vmem:[%s1 + $0x140] sm:$0xff]
    %v737 = vld [vmem:[%s1 + $0x150] sm:$0xff]
    %v738 = vld [vmem:[%s1 + $0x160] sm:$0xff]
    %v739 = vld [vmem:[%s1 + $0x170] sm:$0xff]
    %v740 = vld [vmem:[%s1 + $0x180] sm:$0xff]
    %v741 = vld [vmem:[%s1 + $0x190] sm:$0xff]
    %v742 = vld [vmem:[%s1 + $0x1a0] sm:$0xff]
    %v743 = vld [vmem:[%s1 + $0x1b0] sm:$0xff]
    %v744 = vld [vmem:[%s2 + $0x3] ss:$0 sm:$0xff]
    %v746 = vsel %vm93, %v734, 0
    %v749 = vsel %vm93, %v735, 0
    %751 = vmatpush.msra.mxu0 0.0
    %752 = vmatpush.msra.mxu0 0.0
    %753 = vmatpush.msra.mxu0 0.0
    %754 = vmatpush.msra.mxu0 0.0
    %755 = vmatpush.msra.mxu0 0.0
    %756 = vmatpush.msra.mxu0 0.0
    %757 = vmatpush.msra.mxu0 0.0
    %758 = vmatpush.msra.mxu0 0.0
    %759 = vmatpush.msra.mxu0 %v743
    %760 = vmatpush.msra.mxu0 %v742
    %761 = vmatpush.msra.mxu0 %v741
    %762 = vmatpush.msra.mxu0 %v740
    %763 = vmatpush.msra.mxu0 %v739
    %764 = vmatpush.msra.mxu0 %v738
    %765 = vmatpush.msra.mxu0 %v737
    %766 = vmatpush.msra.mxu0 %v736
    %767 = vmatmul.f32.gmra.mxu0 %v746
    %v768 = vpop.f32.mrf.mxu0
    %v769 = vadd.f32 %v744, %v768
    %770 = vmatmul.f32.gmra.mxu0 %v749
    %v771 = vpop.f32.mrf.mxu0
    %v772 = vadd.f32 %v744, %v771
    %773 = vdwg.mxu0
    %v774 = vmax.f32 %v769, 0.0
    %v775 = vmax.f32 %v772, 0.0
    %v776 = vld [vmem:[%s1 + $0x1c0] sm:$0xff]
    %v777 = vld [vmem:[%s1 + $0x1d0] sm:$0xff]
    %v778 = vld [vmem:[%s1 + $0x1e0] sm:$0xff]
    %v779 = vld [vmem:[%s1 + $0x1f0] sm:$0xff]
    %v780 = vld [vmem:[%s1 + $0x200] sm:$0xff]
    %v781 = vld [vmem:[%s1 + $0x210] sm:$0xff]
    %v782 = vld [vmem:[%s1 + $0x220] sm:$0xff]
    %v783 = vld [vmem:[%s1 + $0x230] sm:$0xff]
    %v784 = vld [vmem:[%s1 + $0x240] sm:$0xff]
    %v785 = vld [vmem:[%s1 + $0x250] sm:$0xff]
    %v786 = vld [vmem:[%s1 + $0x260] sm:$0xff]
    %v787 = vld [vmem:[%s1 + $0x270] sm:$0xff]
    %v788 = vld [vmem:[%s1 + $0x280] sm:$0xff]
    %v789 = vld [vmem:[%s1 + $0x290] sm:$0xff]
    %v790 = vld [vmem:[%s1 + $0x2a0] sm:$0xff]
    %v791 = vld [vmem:[%s1 + $0x2b0] sm:$0xff]
    %v792 = vld [vmem:[%s2 + $0x4] ss:$0 sm:$0xff]
    %793 = vmatpush.msra.mxu0 %v791
    %794 = vmatpush.msra.mxu0 %v790
    %795 = vmatpush.msra.mxu0 %v789
    %796 = vmatpush.msra.mxu0 %v788
    %797 = vmatpush.msra.mxu0 %v787
    %798 = vmatpush.msra.mxu0 %v786
    %799 = vmatpush.msra.mxu0 %v785
    %800 = vmatpush.msra.mxu0 %v784
    %801 = vmatpush.msra.mxu0 %v783
    %802 = vmatpush.msra.mxu0 %v782
    %803 = vmatpush.msra.mxu0 %v781
    %804 = vmatpush.msra.mxu0 %v780
    %805 = vmatpush.msra.mxu0 %v779
    %806 = vmatpush.msra.mxu0 %v778
    %807 = vmatpush.msra.mxu0 %v777
    %808 = vmatpush.msra.mxu0 %v776
    %809 = vmatmul.f32.gmra.mxu0 %v774
    %v810 = vpop.f32.mrf.mxu0
    %v811 = vadd.f32 %v792, %v810
    %812 = vmatmul.f32.gmra.mxu0 %v775
    %v813 = vpop.f32.mrf.mxu0
    %v814 = vadd.f32 %v792, %v813
    %815 = vdwg.mxu0
    %v816 = vadd.f32 %v734, %v811
    %v817 = vadd.f32 %v735, %v814
    %v818 = vld [vmem:[%s2 + $0x7] ss:$0 sm:$0xff]
    %v819 = vld [vmem:[%s2 + $0x10] ss:$0 sm:$0xff]
    %v820 = vsel %vm93, %v816, 0.0
    %821 = vadd.xlane.f32.xlu0 %v820
    %v822 = vpop.xlane.xlu0 %821
    %v823 = vsel %vm93, %v817, 0.0
    %824 = vadd.xlane.f32.xlu0 %v823
    %v825 = vpop.xlane.xlu0 %824
    %v826 = vmul.f32 %v822, %v693
    %v827 = vmul.f32 %v825, %v693
    %v828 = vsub.f32 %v816, %v826
    %v829 = vsub.f32 %v817, %v827
    %v830 = vmul.f32 %v828, %v828
    %v831 = vmul.f32 %v829, %v829
    %v832 = vsel %vm93, %v830, 0.0
    %833 = vadd.xlane.f32.xlu0 %v832
    %v834 = vpop.xlane.xlu0 %833
    %v835 = vsel %vm93, %v831, 0.0
    %836 = vadd.xlane.f32.xlu0 %v835
    %v837 = vpop.xlane.xlu0 %836
    %v838 = vmul.f32 %v834, %v693
    %v839 = vmul.f32 %v837, %v693
    %v840 = vadd.f32 %v838, 1e-05
    %v841 = vadd.f32 %v839, 1e-05
    %v842 = vrsqrt.pop %v840
    %v843 = vmul.f32 %v842, %v840
    %v844 = vmul.f32 %v843, %v842
    %v845 = vmul.f32 0.5, %v844
    %v846 = vsub.f32 1.5, %v845
    %v847 = vmul.f32 %v842, %v846
    %vm848 = vweird.f32 %v840
    %vm849 = vweird.f32 %v842
    %vm850 = vmor %vm848, %vm849
    %v851 = vsel %vm850, %v842, %v847
    %v852 = vrsqrt.pop %v841
    %v853 = vmul.f32 %v852, %v841
    %v854 = vmul.f32 %v853, %v852
    %v855 = vmul.f32 0.5, %v854
    %v856 = vsub.f32 1.5, %v855
    %v857 = vmul.f32 %v852, %v856
    %vm858 = vweird.f32 %v841
    %vm859 = vweird.f32 %v852
    %vm860 = vmor %vm858, %vm859
    %v861 = vsel %vm860, %v852, %v857
    %v862 = vmul.f32 %v828, %v851
    %v863 = vmul.f32 %v829, %v861
    %v864 = vmul.f32 %v862, %v818
    %v865 = vmul.f32 %v863, %v818
    %v866 = vadd.f32 %v864, %v819
    %v867 = vadd.f32 %v865, %v819
    %v868 = vld [vmem:[%s1 + $0x2c0] sm:$0xff]
    %v869 = vld [vmem:[%s1 + $0x2c8] sm:$0xff]
    %v870 = vld [vmem:[%s1 + $0x2d0] sm:$0xff]
    %v871 = vld [vmem:[%s1 + $0x2d8] sm:$0xff]
    %v872 = vld [vmem:[%s1 + $0x2e0] sm:$0xff]
    %v873 = vld [vmem:[%s1 + $0x2e8] sm:$0xff]
    %v874 = vld [vmem:[%s1 + $0x2f0] sm:$0xff]
    %v875 = vld [vmem:[%s1 + $0x2f8] sm:$0xff]
    %v876 = vld [vmem:[%s1 + $0x300] sm:$0xff]
    %v877 = vld [vmem:[%s1 + $0x308] sm:$0xff]
    %v878 = vld [vmem:[%s1 + $0x310] sm:$0xff]
    %v879 = vld [vmem:[%s1 + $0x318] sm:$0xff]
    %v880 = vld [vmem:[%s1 + $0x320] sm:$0xff]
    %v881 = vld [vmem:[%s1 + $0x328] sm:$0xff]
    %v882 = vld [vmem:[%s1 + $0x330] sm:$0xff]
    %v883 = vld [vmem:[%s1 + $0x338] sm:$0xff]
    %s884 = scalar_lea.vmem %s2, 17
    %v885 = vld [vmem:[%s884] ss:$8 sm:$0x3]
    %v887 = vperm.slane %v885, 0
    %v888 = vperm.slane %v885, 1
    %v892 = vsel %vm93, %v866, 0
    %v895 = vsel %vm93, %v867, 0
    %897 = vmatpush.msra.mxu0 0.0
    %898 = vmatpush.msra.mxu0 0.0
    %899 = vmatpush.msra.mxu0 0.0
    %900 = vmatpush.msra.mxu0 0.0
    %901 = vmatpush.msra.mxu0 0.0
    %902 = vmatpush.msra.mxu0 0.0
    %903 = vmatpush.msra.mxu0 0.0
    %904 = vmatpush.msra.mxu0 0.0
    %905 = vmatpush.msra.mxu0 %v882
    %906 = vmatpush.msra.mxu0 %v880
    %907 = vmatpush.msra.mxu0 %v878
    %908 = vmatpush.msra.mxu0 %v876
    %909 = vmatpush.msra.mxu0 %v874
    %910 = vmatpush.msra.mxu0 %v872
    %911 = vmatpush.msra.mxu0 %v870
    %912 = vmatpush.msra.mxu0 %v868
    %913 = vmatmul.f32.gmra.mxu0 %v892
    %v914 = vpop.f32.mrf.mxu0
    %v915 = vadd.f32 %v887, %v914
    %916 = vmatmul.f32.gmra.mxu0 %v895
    %v917 = vpop.f32.mrf.mxu0
    %v918 = vadd.f32 %v887, %v917
    %919 = vdwg.mxu0
    %920 = vmatpush.msra.mxu0 0.0
    %921 = vmatpush.msra.mxu0 0.0
    %922 = vmatpush.msra.mxu0 0.0
    %923 = vmatpush.msra.mxu0 0.0
    %924 = vmatpush.msra.mxu0 0.0
    %925 = vmatpush.msra.mxu0 0.0
    %926 = vmatpush.msra.mxu0 0.0
    %927 = vmatpush.msra.mxu0 0.0
    %928 = vmatpush.msra.mxu0 %v883
    %929 = vmatpush.msra.mxu0 %v881
    %930 = vmatpush.msra.mxu0 %v879
    %931 = vmatpush.msra.mxu0 %v877
    %932 = vmatpush.msra.mxu0 %v875
    %933 = vmatpush.msra.mxu0 %v873
    %934 = vmatpush.msra.mxu0 %v871
    %935 = vmatpush.msra.mxu0 %v869
    %936 = vmatmul.f32.gmra.mxu0 %v892
    %v937 = vpop.f32.mrf.mxu0
    %v938 = vadd.f32 %v888, %v937
    %939 = vmatmul.f32.gmra.mxu0 %v895
    %v940 = vpop.f32.mrf.mxu0
    %v941 = vadd.f32 %v888, %v940
    %942 = vdwg.mxu0
    %944 = vrot.lane.b32.xlu0 %v915, 64
    %v945 = vpop.permute.xlu0 %944
    %947 = vxpose.xlu0.b32.start [1/16] %v945, 128
    %948 = vxpose.xlu0.b32.cont [2/16] 0.0, 128
    %949 = vxpose.xlu0.b32.cont [3/16] 0.0, 128
    %950 = vxpose.xlu0.b32.cont [4/16] 0.0, 128
    %951 = vxpose.xlu0.b32.cont [5/16] 0.0, 128
    %952 = vxpose.xlu0.b32.cont [6/16] 0.0, 128
    %953 = vxpose.xlu0.b32.cont [7/16] 0.0, 128
    %954 = vxpose.xlu0.b32.cont [8/16] 0.0, 128
    %955 = vxpose.xlu0.b32.cont [9/16] 0.0, 128
    %956 = vxpose.xlu0.b32.cont [10/16] 0.0, 128
    %957 = vxpose.xlu0.b32.cont [11/16] 0.0, 128
    %958 = vxpose.xlu0.b32.cont [12/16] 0.0, 128
    %959 = vxpose.xlu0.b32.cont [13/16] 0.0, 128
    %960 = vxpose.xlu0.b32.cont [14/16] 0.0, 128
    %961 = vxpose.xlu0.b32.cont [15/16] 0.0, 128
    %962 = vxpose.xlu0.b32.end [16/16] 0.0, 128
    %v963 = vpop.trf.xlu0
    %v964 = vpop.trf.xlu0
    %v965 = vpop.trf.xlu0
    %v966 = vpop.trf.xlu0
    %v967 = vpop.trf.xlu0
    %v968 = vpop.trf.xlu0
    %v969 = vpop.trf.xlu0
    %v970 = vpop.trf.xlu0
    %v971 = vpop.trf.xlu0
    %v972 = vpop.trf.xlu0
    %v973 = vpop.trf.xlu0
    %v974 = vpop.trf.xlu0
    %v975 = vpop.trf.xlu0
    %v976 = vpop.trf.xlu0
    %v977 = vpop.trf.xlu0
    %v978 = vpop.trf.xlu0
    %v980 = vsel %vm182, %v963, 0
    %v983 = vsel %vm182, %v964, 0
    %v986 = vsel %vm182, %v965, 0
    %v989 = vsel %vm182, %v966, 0
    %v992 = vsel %vm182, %v967, 0
    %v995 = vsel %vm182, %v968, 0
    %v998 = vsel %vm182, %v969, 0
    %v1001 = vsel %vm182, %v970, 0
    %1003 = vmatpush.msra.mxu0 0.0
    %1004 = vmatpush.msra.mxu0 0.0
    %1005 = vmatpush.msra.mxu0 0.0
    %1006 = vmatpush.msra.mxu0 0.0
    %1007 = vmatpush.msra.mxu0 0.0
    %1008 = vmatpush.msra.mxu0 0.0
    %1009 = vmatpush.msra.mxu0 0.0
    %1010 = vmatpush.msra.mxu0 0.0
    %1011 = vmatpush.msra.mxu0 0.0
    %1012 = vmatpush.msra.mxu0 0.0
    %1013 = vmatpush.msra.mxu0 0.0
    %1014 = vmatpush.msra.mxu0 0.0
    %1015 = vmatpush.msra.mxu0 0.0
    %1016 = vmatpush.msra.mxu0 0.0
    %1017 = vmatpush.msra.mxu0 0.0
    %1018 = vmatpush.msra.mxu0 %v23
    %1019 = vmatmul.f32.gmra.mxu0 %v980
    %v1020 = vpop.f32.mrf.mxu0
    %v1021 = vadd.f32 0.0, %v1020
    %1022 = vmatmul.f32.gmra.mxu0 %v983
    %v1023 = vpop.f32.mrf.mxu0
    %v1024 = vadd.f32 0.0, %v1023
    %1025 = vmatmul.f32.gmra.mxu0 %v986
    %v1026 = vpop.f32.mrf.mxu0
    %v1027 = vadd.f32 0.0, %v1026
    %1028 = vmatmul.f32.gmra.mxu0 %v989
    %v1029 = vpop.f32.mrf.mxu0
    %v1030 = vadd.f32 0.0, %v1029
    %1031 = vmatmul.f32.gmra.mxu0 %v992
    %v1032 = vpop.f32.mrf.mxu0
    %v1033 = vadd.f32 0.0, %v1032
    %1034 = vmatmul.f32.gmra.mxu0 %v995
    %v1035 = vpop.f32.mrf.mxu0
    %v1036 = vadd.f32 0.0, %v1035
    %1037 = vmatmul.f32.gmra.mxu0 %v998
    %v1038 = vpop.f32.mrf.mxu0
    %v1039 = vadd.f32 0.0, %v1038
    %1040 = vmatmul.f32.gmra.mxu0 %v1001
    %v1041 = vpop.f32.mrf.mxu0
    %v1042 = vadd.f32 0.0, %v1041
    %1043 = vdwg.mxu0
    %v1044 = vmul.f32 %v1021, %v15
    %v1045 = vmul.f32 %v1024, %v16
    %v1046 = vmul.f32 %v1027, %v17
    %v1047 = vmul.f32 %v1030, %v18
    %v1048 = vmul.f32 %v1033, %v19
    %v1049 = vmul.f32 %v1036, %v20
    %v1050 = vmul.f32 %v1039, %v21
    %v1051 = vmul.f32 %v1042, %v22
    %1052 = vmatpush.msra.mxu0 0.0
    %1053 = vmatpush.msra.mxu0 0.0
    %1054 = vmatpush.msra.mxu0 0.0
    %1055 = vmatpush.msra.mxu0 0.0
    %1056 = vmatpush.msra.mxu0 0.0
    %1057 = vmatpush.msra.mxu0 0.0
    %1058 = vmatpush.msra.mxu0 0.0
    %1059 = vmatpush.msra.mxu0 0.0
    %1060 = vmatpush.msra.mxu0 0.0
    %1061 = vmatpush.msra.mxu0 0.0
    %1062 = vmatpush.msra.mxu0 0.0
    %1063 = vmatpush.msra.mxu0 0.0
    %1064 = vmatpush.msra.mxu0 0.0
    %1065 = vmatpush.msra.mxu0 0.0
    %1066 = vmatpush.msra.mxu0 0.0
    %1067 = vmatpush.msra.mxu0 %v938
    %1068 = vmatmul.f32.gmra.mxu0 %v257
    %v1069 = vpop.f32.mrf.mxu0
    %v1070 = vadd.f32 0.0, %v1069
    %1071 = vmatmul.f32.gmra.mxu0 %v260
    %v1072 = vpop.f32.mrf.mxu0
    %v1073 = vadd.f32 0.0, %v1072
    %1074 = vmatmul.f32.gmra.mxu0 %v263
    %v1075 = vpop.f32.mrf.mxu0
    %v1076 = vadd.f32 0.0, %v1075
    %1077 = vmatmul.f32.gmra.mxu0 %v266
    %v1078 = vpop.f32.mrf.mxu0
    %v1079 = vadd.f32 0.0, %v1078
    %1080 = vmatmul.f32.gmra.mxu0 %v269
    %v1081 = vpop.f32.mrf.mxu0
    %v1082 = vadd.f32 0.0, %v1081
    %1083 = vmatmul.f32.gmra.mxu0 %v272
    %v1084 = vpop.f32.mrf.mxu0
    %v1085 = vadd.f32 0.0, %v1084
    %1086 = vmatmul.f32.gmra.mxu0 %v275
    %v1087 = vpop.f32.mrf.mxu0
    %v1088 = vadd.f32 0.0, %v1087
    %1089 = vmatmul.f32.gmra.mxu0 %v278
    %v1090 = vpop.f32.mrf.mxu0
    %v1091 = vadd.f32 0.0, %v1090
    %1092 = vdwg.mxu0
    %v1093 = vmul.f32 %v1070, %v15
    %v1094 = vmul.f32 %v1073, %v16
    %v1095 = vmul.f32 %v1076, %v17
    %v1096 = vmul.f32 %v1079, %v18
    %v1097 = vmul.f32 %v1082, %v19
    %v1098 = vmul.f32 %v1085, %v20
    %v1099 = vmul.f32 %v1088, %v21
    %v1100 = vmul.f32 %v1091, %v22
    %v1101 = vsel %vm93, %v915, 0
    %1103 = vmatpush.msra.mxu0 0.0
    %1104 = vmatpush.msra.mxu0 0.0
    %1105 = vmatpush.msra.mxu0 0.0
    %1106 = vmatpush.msra.mxu0 0.0
    %1107 = vmatpush.msra.mxu0 0.0
    %1108 = vmatpush.msra.mxu0 0.0
    %1109 = vmatpush.msra.mxu0 0.0
    %1110 = vmatpush.msra.mxu0 0.0
    %1111 = vmatpush.msra.mxu0 %v1051
    %1112 = vmatpush.msra.mxu0 %v1050
    %1113 = vmatpush.msra.mxu0 %v1049
    %1114 = vmatpush.msra.mxu0 %v1048
    %1115 = vmatpush.msra.mxu0 %v1047
    %1116 = vmatpush.msra.mxu0 %v1046
    %1117 = vmatpush.msra.mxu0 %v1045
    %1118 = vmatpush.msra.mxu0 %v1044
    %1119 = vmatmul.f32.gmra.mxu0 %v1101
    %v1120 = vpop.f32.mrf.mxu0
    %v1121 = vadd.f32 0.0, %v1120
    %1122 = vdwg.mxu0
    %v1123 = vsel %vm93, %v1121, -inf
    %1124 = vmax.xlane.f32.xlu0 %v1123
    %v1125 = vpop.xlane.xlu0 %1124
    %v1126 = vsub.f32 %v1121, %v1125
    %v1127 = vmul.f32 %v1126, 1.442695
    %v1128 = vpow.pop %v1127
    %v1130 = vsel %vm93, %v1128, 0
    %1132 = vmatpush.msra.mxu0 0.0
    %1133 = vmatpush.msra.mxu0 0.0
    %1134 = vmatpush.msra.mxu0 0.0
    %1135 = vmatpush.msra.mxu0 0.0
    %1136 = vmatpush.msra.mxu0 0.0
    %1137 = vmatpush.msra.mxu0 0.0
    %1138 = vmatpush.msra.mxu0 0.0
    %1139 = vmatpush.msra.mxu0 0.0
    %1140 = vmatpush.msra.mxu0 %v22
    %1141 = vmatpush.msra.mxu0 %v21
    %1142 = vmatpush.msra.mxu0 %v20
    %1143 = vmatpush.msra.mxu0 %v19
    %1144 = vmatpush.msra.mxu0 %v18
    %1145 = vmatpush.msra.mxu0 %v17
    %1146 = vmatpush.msra.mxu0 %v16
    %1147 = vmatpush.msra.mxu0 %v15
    %1148 = vmatmul.f32.gmra.mxu0 %v1130
    %v1149 = vpop.f32.mrf.mxu0
    %v1150 = vadd.f32 0.0, %v1149
    %1151 = vdwg.mxu0
    %v1152 = vrcp.pop %v1150
    %v1153 = vmul.f32 %v1128, %v1152
    %v1155 = vsel %vm93, %v1153, 0
    %1157 = vmatpush.msra.mxu0 0.0
    %1158 = vmatpush.msra.mxu0 0.0
    %1159 = vmatpush.msra.mxu0 0.0
    %1160 = vmatpush.msra.mxu0 0.0
    %1161 = vmatpush.msra.mxu0 0.0
    %1162 = vmatpush.msra.mxu0 0.0
    %1163 = vmatpush.msra.mxu0 0.0
    %1164 = vmatpush.msra.mxu0 0.0
    %1165 = vmatpush.msra.mxu0 %v1100
    %1166 = vmatpush.msra.mxu0 %v1099
    %1167 = vmatpush.msra.mxu0 %v1098
    %1168 = vmatpush.msra.mxu0 %v1097
    %1169 = vmatpush.msra.mxu0 %v1096
    %1170 = vmatpush.msra.mxu0 %v1095
    %1171 = vmatpush.msra.mxu0 %v1094
    %1172 = vmatpush.msra.mxu0 %v1093
    %1173 = vmatmul.f32.gmra.mxu0 %v1155
    %v1174 = vpop.f32.mrf.mxu0
    %v1175 = vadd.f32 0.0, %v1174
    %1176 = vdwg.mxu0
    %1178 = vrot.lane.b32.xlu0 %v918, 64
    %v1179 = vpop.permute.xlu0 %1178
    %1181 = vxpose.xlu0.b32.start [1/16] %v1179, 128
    %1182 = vxpose.xlu0.b32.cont [2/16] 0.0, 128
    %1183 = vxpose.xlu0.b32.cont [3/16] 0.0, 128
    %1184 = vxpose.xlu0.b32.cont [4/16] 0.0, 128
    %1185 = vxpose.xlu0.b32.cont [5/16] 0.0, 128
    %1186 = vxpose.xlu0.b32.cont [6/16] 0.0, 128
    %1187 = vxpose.xlu0.b32.cont [7/16] 0.0, 128
    %1188 = vxpose.xlu0.b32.cont [8/16] 0.0, 128
    %1189 = vxpose.xlu0.b32.cont [9/16] 0.0, 128
    %1190 = vxpose.xlu0.b32.cont [10/16] 0.0, 128
    %1191 = vxpose.xlu0.b32.cont [11/16] 0.0, 128
    %1192 = vxpose.xlu0.b32.cont [12/16] 0.0, 128
    %1193 = vxpose.xlu0.b32.cont [13/16] 0.0, 128
    %1194 = vxpose.xlu0.b32.cont [14/16] 0.0, 128
    %1195 = vxpose.xlu0.b32.cont [15/16] 0.0, 128
    %1196 = vxpose.xlu0.b32.end [16/16] 0.0, 128
    %v1197 = vpop.trf.xlu0
    %v1198 = vpop.trf.xlu0
    %v1199 = vpop.trf.xlu0
    %v1200 = vpop.trf.xlu0
    %v1201 = vpop.trf.xlu0
    %v1202 = vpop.trf.xlu0
    %v1203 = vpop.trf.xlu0
    %v1204 = vpop.trf.xlu0
    %v1205 = vpop.trf.xlu0
    %v1206 = vpop.trf.xlu0
    %v1207 = vpop.trf.xlu0
    %v1208 = vpop.trf.xlu0
    %v1209 = vpop.trf.xlu0
    %v1210 = vpop.trf.xlu0
    %v1211 = vpop.trf.xlu0
    %v1212 = vpop.trf.xlu0
    %v1214 = vsel %vm182, %v1197, 0
    %v1217 = vsel %vm182, %v1198, 0
    %v1220 = vsel %vm182, %v1199, 0
    %v1223 = vsel %vm182, %v1200, 0
    %v1226 = vsel %vm182, %v1201, 0
    %v1229 = vsel %vm182, %v1202, 0
    %v1232 = vsel %vm182, %v1203, 0
    %v1235 = vsel %vm182, %v1204, 0
    %1237 = vmatpush.msra.mxu0 0.0
    %1238 = vmatpush.msra.mxu0 0.0
    %1239 = vmatpush.msra.mxu0 0.0
    %1240 = vmatpush.msra.mxu0 0.0
    %1241 = vmatpush.msra.mxu0 0.0
    %1242 = vmatpush.msra.mxu0 0.0
    %1243 = vmatpush.msra.mxu0 0.0
    %1244 = vmatpush.msra.mxu0 0.0
    %1245 = vmatpush.msra.mxu0 0.0
    %1246 = vmatpush.msra.mxu0 0.0
    %1247 = vmatpush.msra.mxu0 0.0
    %1248 = vmatpush.msra.mxu0 0.0
    %1249 = vmatpush.msra.mxu0 0.0
    %1250 = vmatpush.msra.mxu0 0.0
    %1251 = vmatpush.msra.mxu0 0.0
    %1252 = vmatpush.msra.mxu0 %v23
    %1253 = vmatmul.f32.gmra.mxu0 %v1214
    %v1254 = vpop.f32.mrf.mxu0
    %v1255 = vadd.f32 0.0, %v1254
    %1256 = vmatmul.f32.gmra.mxu0 %v1217
    %v1257 = vpop.f32.mrf.mxu0
    %v1258 = vadd.f32 0.0, %v1257
    %1259 = vmatmul.f32.gmra.mxu0 %v1220
    %v1260 = vpop.f32.mrf.mxu0
    %v1261 = vadd.f32 0.0, %v1260
    %1262 = vmatmul.f32.gmra.mxu0 %v1223
    %v1263 = vpop.f32.mrf.mxu0
    %v1264 = vadd.f32 0.0, %v1263
    %1265 = vmatmul.f32.gmra.mxu0 %v1226
    %v1266 = vpop.f32.mrf.mxu0
    %v1267 = vadd.f32 0.0, %v1266
    %1268 = vmatmul.f32.gmra.mxu0 %v1229
    %v1269 = vpop.f32.mrf.mxu0
    %v1270 = vadd.f32 0.0, %v1269
    %1271 = vmatmul.f32.gmra.mxu0 %v1232
    %v1272 = vpop.f32.mrf.mxu0
    %v1273 = vadd.f32 0.0, %v1272
    %1274 = vmatmul.f32.gmra.mxu0 %v1235
    %v1275 = vpop.f32.mrf.mxu0
    %v1276 = vadd.f32 0.0, %v1275
    %1277 = vdwg.mxu0
    %v1278 = vmul.f32 %v1255, %v15
    %v1279 = vmul.f32 %v1258, %v16
    %v1280 = vmul.f32 %v1261, %v17
    %v1281 = vmul.f32 %v1264, %v18
    %v1282 = vmul.f32 %v1267, %v19
    %v1283 = vmul.f32 %v1270, %v20
    %v1284 = vmul.f32 %v1273, %v21
    %v1285 = vmul.f32 %v1276, %v22
    %1286 = vmatpush.msra.mxu0 0.0
    %1287 = vmatpush.msra.mxu0 0.0
    %1288 = vmatpush.msra.mxu0 0.0
    %1289 = vmatpush.msra.mxu0 0.0
    %1290 = vmatpush.msra.mxu0 0.0
    %1291 = vmatpush.msra.mxu0 0.0
    %1292 = vmatpush.msra.mxu0 0.0
    %1293 = vmatpush.msra.mxu0 0.0
    %1294 = vmatpush.msra.mxu0 0.0
    %1295 = vmatpush.msra.mxu0 0.0
    %1296 = vmatpush.msra.mxu0 0.0
    %1297 = vmatpush.msra.mxu0 0.0
    %1298 = vmatpush.msra.mxu0 0.0
    %1299 = vmatpush.msra.mxu0 0.0
    %1300 = vmatpush.msra.mxu0 0.0
    %1301 = vmatpush.msra.mxu0 %v941
    %1302 = vmatmul.f32.gmra.mxu0 %v257
    %v1303 = vpop.f32.mrf.mxu0
    %v1304 = vadd.f32 0.0, %v1303
    %1305 = vmatmul.f32.gmra.mxu0 %v260
    %v1306 = vpop.f32.mrf.mxu0
    %v1307 = vadd.f32 0.0, %v1306
    %1308 = vmatmul.f32.gmra.mxu0 %v263
    %v1309 = vpop.f32.mrf.mxu0
    %v1310 = vadd.f32 0.0, %v1309
    %1311 = vmatmul.f32.gmra.mxu0 %v266
    %v1312 = vpop.f32.mrf.mxu0
    %v1313 = vadd.f32 0.0, %v1312
    %1314 = vmatmul.f32.gmra.mxu0 %v269
    %v1315 = vpop.f32.mrf.mxu0
    %v1316 = vadd.f32 0.0, %v1315
    %1317 = vmatmul.f32.gmra.mxu0 %v272
    %v1318 = vpop.f32.mrf.mxu0
    %v1319 = vadd.f32 0.0, %v1318
    %1320 = vmatmul.f32.gmra.mxu0 %v275
    %v1321 = vpop.f32.mrf.mxu0
    %v1322 = vadd.f32 0.0, %v1321
    %1323 = vmatmul.f32.gmra.mxu0 %v278
    %v1324 = vpop.f32.mrf.mxu0
    %v1325 = vadd.f32 0.0, %v1324
    %1326 = vdwg.mxu0
    %v1327 = vmul.f32 %v1304, %v15
    %v1328 = vmul.f32 %v1307, %v16
    %v1329 = vmul.f32 %v1310, %v17
    %v1330 = vmul.f32 %v1313, %v18
    %v1331 = vmul.f32 %v1316, %v19
    %v1332 = vmul.f32 %v1319, %v20
    %v1333 = vmul.f32 %v1322, %v21
    %v1334 = vmul.f32 %v1325, %v22
    %v1335 = vsel %vm93, %v918, 0
    %1337 = vmatpush.msra.mxu0 0.0
    %1338 = vmatpush.msra.mxu0 0.0
    %1339 = vmatpush.msra.mxu0 0.0
    %1340 = vmatpush.msra.mxu0 0.0
    %1341 = vmatpush.msra.mxu0 0.0
    %1342 = vmatpush.msra.mxu0 0.0
    %1343 = vmatpush.msra.mxu0 0.0
    %1344 = vmatpush.msra.mxu0 0.0
    %1345 = vmatpush.msra.mxu0 %v1285
    %1346 = vmatpush.msra.mxu0 %v1284
    %1347 = vmatpush.msra.mxu0 %v1283
    %1348 = vmatpush.msra.mxu0 %v1282
    %1349 = vmatpush.msra.mxu0 %v1281
    %1350 = vmatpush.msra.mxu0 %v1280
    %1351 = vmatpush.msra.mxu0 %v1279
    %1352 = vmatpush.msra.mxu0 %v1278
    %1353 = vmatmul.f32.gmra.mxu0 %v1335
    %v1354 = vpop.f32.mrf.mxu0
    %v1355 = vadd.f32 0.0, %v1354
    %1356 = vdwg.mxu0
    %v1357 = vsel %vm93, %v1355, -inf
    %1358 = vmax.xlane.f32.xlu0 %v1357
    %v1359 = vpop.xlane.xlu0 %1358
    %v1360 = vsub.f32 %v1355, %v1359
    %v1361 = vmul.f32 %v1360, 1.442695
    %v1362 = vpow.pop %v1361
    %v1364 = vsel %vm93, %v1362, 0
    %1366 = vmatpush.msra.mxu0 0.0
    %1367 = vmatpush.msra.mxu0 0.0
    %1368 = vmatpush.msra.mxu0 0.0
    %1369 = vmatpush.msra.mxu0 0.0
    %1370 = vmatpush.msra.mxu0 0.0
    %1371 = vmatpush.msra.mxu0 0.0
    %1372 = vmatpush.msra.mxu0 0.0
    %1373 = vmatpush.msra.mxu0 0.0
    %1374 = vmatpush.msra.mxu0 %v22
    %1375 = vmatpush.msra.mxu0 %v21
    %1376 = vmatpush.msra.mxu0 %v20
    %1377 = vmatpush.msra.mxu0 %v19
    %1378 = vmatpush.msra.mxu0 %v18
    %1379 = vmatpush.msra.mxu0 %v17
    %1380 = vmatpush.msra.mxu0 %v16
    %1381 = vmatpush.msra.mxu0 %v15
    %1382 = vmatmul.f32.gmra.mxu0 %v1364
    %v1383 = vpop.f32.mrf.mxu0
    %v1384 = vadd.f32 0.0, %v1383
    %1385 = vdwg.mxu0
    %v1386 = vrcp.pop %v1384
    %v1387 = vmul.f32 %v1362, %v1386
    %v1389 = vsel %vm93, %v1387, 0
    %1391 = vmatpush.msra.mxu0 0.0
    %1392 = vmatpush.msra.mxu0 0.0
    %1393 = vmatpush.msra.mxu0 0.0
    %1394 = vmatpush.msra.mxu0 0.0
    %1395 = vmatpush.msra.mxu0 0.0
    %1396 = vmatpush.msra.mxu0 0.0
    %1397 = vmatpush.msra.mxu0 0.0
    %1398 = vmatpush.msra.mxu0 0.0
    %1399 = vmatpush.msra.mxu0 %v1334
    %1400 = vmatpush.msra.mxu0 %v1333
    %1401 = vmatpush.msra.mxu0 %v1332
    %1402 = vmatpush.msra.mxu0 %v1331
    %1403 = vmatpush.msra.mxu0 %v1330
    %1404 = vmatpush.msra.mxu0 %v1329
    %1405 = vmatpush.msra.mxu0 %v1328
    %1406 = vmatpush.msra.mxu0 %v1327
    %1407 = vmatmul.f32.gmra.mxu0 %v1389
    %v1408 = vpop.f32.mrf.mxu0
    %v1409 = vadd.f32 0.0, %v1408
    %1410 = vdwg.mxu0
    %v1411 = vld [vmem:[%s1 + $0x340] sm:$0xff]
    %v1412 = vld [vmem:[%s1 + $0x350] sm:$0xff]
    %v1413 = vld [vmem:[%s1 + $0x360] sm:$0xff]
    %v1414 = vld [vmem:[%s1 + $0x370] sm:$0xff]
    %v1415 = vld [vmem:[%s1 + $0x380] sm:$0xff]
    %v1416 = vld [vmem:[%s1 + $0x390] sm:$0xff]
    %v1417 = vld [vmem:[%s1 + $0x3a0] sm:$0xff]
    %v1418 = vld [vmem:[%s1 + $0x3b0] sm:$0xff]
    %v1419 = vld [vmem:[%s2 + $0x12] ss:$0 sm:$0xff]
    %v1421 = vsel %vm93, %v1175, 0
    %v1424 = vsel %vm93, %v1409, 0
    %1426 = vmatpush.msra.mxu0 0.0
    %1427 = vmatpush.msra.mxu0 0.0
    %1428 = vmatpush.msra.mxu0 0.0
    %1429 = vmatpush.msra.mxu0 0.0
    %1430 = vmatpush.msra.mxu0 0.0
    %1431 = vmatpush.msra.mxu0 0.0
    %1432 = vmatpush.msra.mxu0 0.0
    %1433 = vmatpush.msra.mxu0 0.0
    %1434 = vmatpush.msra.mxu0 %v1418
    %1435 = vmatpush.msra.mxu0 %v1417
    %1436 = vmatpush.msra.mxu0 %v1416
    %1437 = vmatpush.msra.mxu0 %v1415
    %1438 = vmatpush.msra.mxu0 %v1414
    %1439 = vmatpush.msra.mxu0 %v1413
    %1440 = vmatpush.msra.mxu0 %v1412
    %1441 = vmatpush.msra.mxu0 %v1411
    %1442 = vmatmul.f32.gmra.mxu0 %v1421
    %v1443 = vpop.f32.mrf.mxu0
    %v1444 = vadd.f32 %v1419, %v1443
    %1445 = vmatmul.f32.gmra.mxu0 %v1424
    %v1446 = vpop.f32.mrf.mxu0
    %v1447 = vadd.f32 %v1419, %v1446
    %1448 = vdwg.mxu0
    %v1449 = vadd.f32 %v866, %v1444
    %v1450 = vadd.f32 %v867, %v1447
    %v1451 = vld [vmem:[%s2 + $0x15] ss:$0 sm:$0xff]
    %v1452 = vld [vmem:[%s2 + $0x16] ss:$0 sm:$0xff]
    %v1453 = vsel %vm93, %v1449, 0.0
    %1454 = vadd.xlane.f32.xlu0 %v1453
    %v1455 = vpop.xlane.xlu0 %1454
    %v1456 = vsel %vm93, %v1450, 0.0
    %1457 = vadd.xlane.f32.xlu0 %v1456
    %v1458 = vpop.xlane.xlu0 %1457
    %v1459 = vmul.f32 %v1455, %v693
    %v1460 = vmul.f32 %v1458, %v693
    %v1461 = vsub.f32 %v1449, %v1459
    %v1462 = vsub.f32 %v1450, %v1460
    %v1463 = vmul.f32 %v1461, %v1461
    %v1464 = vmul.f32 %v1462, %v1462
    %v1465 = vsel %vm93, %v1463, 0.0
    %1466 = vadd.xlane.f32.xlu0 %v1465
    %v1467 = vpop.xlane.xlu0 %1466
    %v1468 = vsel %vm93, %v1464, 0.0
    %1469 = vadd.xlane.f32.xlu0 %v1468
    %v1470 = vpop.xlane.xlu0 %1469
    %v1471 = vmul.f32 %v1467, %v693
    %v1472 = vmul.f32 %v1470, %v693
    %v1473 = vadd.f32 %v1471, 1e-05
    %v1474 = vadd.f32 %v1472, 1e-05
    %v1475 = vrsqrt.pop %v1473
    %v1476 = vmul.f32 %v1475, %v1473
    %v1477 = vmul.f32 %v1476, %v1475
    %v1478 = vmul.f32 0.5, %v1477
    %v1479 = vsub.f32 1.5, %v1478
    %v1480 = vmul.f32 %v1475, %v1479
    %vm1481 = vweird.f32 %v1473
    %vm1482 = vweird.f32 %v1475
    %vm1483 = vmor %vm1481, %vm1482
    %v1484 = vsel %vm1483, %v1475, %v1480
    %v1485 = vrsqrt.pop %v1474
    %v1486 = vmul.f32 %v1485, %v1474
    %v1487 = vmul.f32 %v1486, %v1485
    %v1488 = vmul.f32 0.5, %v1487
    %v1489 = vsub.f32 1.5, %v1488
    %v1490 = vmul.f32 %v1485, %v1489
    %vm1491 = vweird.f32 %v1474
    %vm1492 = vweird.f32 %v1485
    %vm1493 = vmor %vm1491, %vm1492
    %v1494 = vsel %vm1493, %v1485, %v1490
    %v1495 = vmul.f32 %v1461, %v1484
    %v1496 = vmul.f32 %v1462, %v1494
    %v1497 = vmul.f32 %v1495, %v1451
    %v1498 = vmul.f32 %v1496, %v1451
    %v1499 = vadd.f32 %v1497, %v1452
    %v1500 = vadd.f32 %v1498, %v1452
    %v1501 = vld [vmem:[%s1 + $0x3c0] sm:$0xff]
    %v1502 = vld [vmem:[%s1 + $0x3d0] sm:$0xff]
    %v1503 = vld [vmem:[%s1 + $0x3e0] sm:$0xff]
    %v1504 = vld [vmem:[%s1 + $0x3f0] sm:$0xff]
    %v1505 = vld [vmem:[%s1 + $0x400] sm:$0xff]
    %v1506 = vld [vmem:[%s1 + $0x410] sm:$0xff]
    %v1507 = vld [vmem:[%s1 + $0x420] sm:$0xff]
    %v1508 = vld [vmem:[%s1 + $0x430] sm:$0xff]
    %v1509 = vld [vmem:[%s2 + $0x13] ss:$0 sm:$0xff]
    %v1511 = vsel %vm93, %v1499, 0
    %v1514 = vsel %vm93, %v1500, 0
    %1516 = vmatpush.msra.mxu0 0.0
    %1517 = vmatpush.msra.mxu0 0.0
    %1518 = vmatpush.msra.mxu0 0.0
    %1519 = vmatpush.msra.mxu0 0.0
    %1520 = vmatpush.msra.mxu0 0.0
    %1521 = vmatpush.msra.mxu0 0.0
    %1522 = vmatpush.msra.mxu0 0.0
    %1523 = vmatpush.msra.mxu0 0.0
    %1524 = vmatpush.msra.mxu0 %v1508
    %1525 = vmatpush.msra.mxu0 %v1507
    %1526 = vmatpush.msra.mxu0 %v1506
    %1527 = vmatpush.msra.mxu0 %v1505
    %1528 = vmatpush.msra.mxu0 %v1504
    %1529 = vmatpush.msra.mxu0 %v1503
    %1530 = vmatpush.msra.mxu0 %v1502
    %1531 = vmatpush.msra.mxu0 %v1501
    %1532 = vmatmul.f32.gmra.mxu0 %v1511
    %v1533 = vpop.f32.mrf.mxu0
    %v1534 = vadd.f32 %v1509, %v1533
    %1535 = vmatmul.f32.gmra.mxu0 %v1514
    %v1536 = vpop.f32.mrf.mxu0
    %v1537 = vadd.f32 %v1509, %v1536
    %1538 = vdwg.mxu0
    %v1539 = vmax.f32 %v1534, 0.0
    %v1540 = vmax.f32 %v1537, 0.0
    %v1541 = vld [vmem:[%s1 + $0x440] sm:$0xff]
    %v1542 = vld [vmem:[%s1 + $0x450] sm:$0xff]
    %v1543 = vld [vmem:[%s1 + $0x460] sm:$0xff]
    %v1544 = vld [vmem:[%s1 + $0x470] sm:$0xff]
    %v1545 = vld [vmem:[%s1 + $0x480] sm:$0xff]
    %v1546 = vld [vmem:[%s1 + $0x490] sm:$0xff]
    %v1547 = vld [vmem:[%s1 + $0x4a0] sm:$0xff]
    %v1548 = vld [vmem:[%s1 + $0x4b0] sm:$0xff]
    %v1549 = vld [vmem:[%s1 + $0x4c0] sm:$0xff]
    %v1550 = vld [vmem:[%s1 + $0x4d0] sm:$0xff]
    %v1551 = vld [vmem:[%s1 + $0x4e0] sm:$0xff]
    %v1552 = vld [vmem:[%s1 + $0x4f0] sm:$0xff]
    %v1553 = vld [vmem:[%s1 + $0x500] sm:$0xff]
    %v1554 = vld [vmem:[%s1 + $0x510] sm:$0xff]
    %v1555 = vld [vmem:[%s1 + $0x520] sm:$0xff]
    %v1556 = vld [vmem:[%s1 + $0x530] sm:$0xff]
    %v1557 = vld [vmem:[%s2 + $0x14] ss:$0 sm:$0xff]
    %1558 = vmatpush.msra.mxu0 %v1556
    %1559 = vmatpush.msra.mxu0 %v1555
    %1560 = vmatpush.msra.mxu0 %v1554
    %1561 = vmatpush.msra.mxu0 %v1553
    %1562 = vmatpush.msra.mxu0 %v1552
    %1563 = vmatpush.msra.mxu0 %v1551
    %1564 = vmatpush.msra.mxu0 %v1550
    %1565 = vmatpush.msra.mxu0 %v1549
    %1566 = vmatpush.msra.mxu0 %v1548
    %1567 = vmatpush.msra.mxu0 %v1547
    %1568 = vmatpush.msra.mxu0 %v1546
    %1569 = vmatpush.msra.mxu0 %v1545
    %1570 = vmatpush.msra.mxu0 %v1544
    %1571 = vmatpush.msra.mxu0 %v1543
    %1572 = vmatpush.msra.mxu0 %v1542
    %1573 = vmatpush.msra.mxu0 %v1541
    %1574 = vmatmul.f32.gmra.mxu0 %v1539
    %v1575 = vpop.f32.mrf.mxu0
    %v1576 = vadd.f32 %v1557, %v1575
    %1577 = vmatmul.f32.gmra.mxu0 %v1540
    %v1578 = vpop.f32.mrf.mxu0
    %v1579 = vadd.f32 %v1557, %v1578
    %1580 = vdwg.mxu0
    %v1581 = vadd.f32 %v1499, %v1576
    %v1582 = vadd.f32 %v1500, %v1579
    %v1583 = vld [vmem:[%s2 + $0x17] ss:$0 sm:$0xff]
    %v1584 = vld [vmem:[%s2 + $0x20] ss:$0 sm:$0xff]
    %v1585 = vsel %vm93, %v1581, 0.0
    %1586 = vadd.xlane.f32.xlu0 %v1585
    %v1587 = vpop.xlane.xlu0 %1586
    %v1588 = vsel %vm93, %v1582, 0.0
    %1589 = vadd.xlane.f32.xlu0 %v1588
    %v1590 = vpop.xlane.xlu0 %1589
    %v1591 = vmul.f32 %v1587, %v693
    %v1592 = vmul.f32 %v1590, %v693
    %v1593 = vsub.f32 %v1581, %v1591
    %v1594 = vsub.f32 %v1582, %v1592
    %v1595 = vmul.f32 %v1593, %v1593
    %v1596 = vmul.f32 %v1594, %v1594
    %v1597 = vsel %vm93, %v1595, 0.0
    %1598 = vadd.xlane.f32.xlu0 %v1597
    %v1599 = vpop.xlane.xlu0 %1598
    %v1600 = vsel %vm93, %v1596, 0.0
    %1601 = vadd.xlane.f32.xlu0 %v1600
    %v1602 = vpop.xlane.xlu0 %1601
    %v1603 = vmul.f32 %v1599, %v693
    %v1604 = vmul.f32 %v1602, %v693
    %v1605 = vadd.f32 %v1603, 1e-05
    %v1606 = vadd.f32 %v1604, 1e-05
    %v1607 = vrsqrt.pop %v1605
    %v1608 = vmul.f32 %v1607, %v1605
    %v1609 = vmul.f32 %v1608, %v1607
    %v1610 = vmul.f32 0.5, %v1609
    %v1611 = vsub.f32 1.5, %v1610
    %v1612 = vmul.f32 %v1607, %v1611
    %vm1613 = vweird.f32 %v1605
    %vm1614 = vweird.f32 %v1607
    %vm1615 = vmor %vm1613, %vm1614
    %v1616 = vsel %vm1615, %v1607, %v1612
    %v1617 = vrsqrt.pop %v1606
    %v1618 = vmul.f32 %v1617, %v1606
    %v1619 = vmul.f32 %v1618, %v1617
    %v1620 = vmul.f32 0.5, %v1619
    %v1621 = vsub.f32 1.5, %v1620
    %v1622 = vmul.f32 %v1617, %v1621
    %vm1623 = vweird.f32 %v1606
    %vm1624 = vweird.f32 %v1617
    %vm1625 = vmor %vm1623, %vm1624
    %v1626 = vsel %vm1625, %v1617, %v1622
    %v1627 = vmul.f32 %v1593, %v1616
    %v1628 = vmul.f32 %v1594, %v1626
    %v1629 = vmul.f32 %v1627, %v1583
    %v1630 = vmul.f32 %v1628, %v1583
    %v1631 = vadd.f32 %v1629, %v1584
    %v1632 = vadd.f32 %v1630, %v1584
    %vm1633 = vcmask 130048
    %v1635 = vsel %vm1633, %v32, 0
    %1637 = vmatpush.msra.mxu0 0.0
    %1638 = vmatpush.msra.mxu0 0.0
    %1639 = vmatpush.msra.mxu0 0.0
    %1640 = vmatpush.msra.mxu0 0.0
    %1641 = vmatpush.msra.mxu0 0.0
    %1642 = vmatpush.msra.mxu0 0.0
    %1643 = vmatpush.msra.mxu0 0.0
    %1644 = vmatpush.msra.mxu0 0.0
    %1645 = vmatpush.msra.mxu0 0.0
    %1646 = vmatpush.msra.mxu0 0.0
    %1647 = vmatpush.msra.mxu0 0.0
    %1648 = vmatpush.msra.mxu0 0.0
    %1649 = vmatpush.msra.mxu0 0.0
    %1650 = vmatpush.msra.mxu0 0.0
    %1651 = vmatpush.msra.mxu0 %v1632
    %1652 = vmatpush.msra.mxu0 %v1631
    %1653 = vmatmul.f32.gmra.mxu0 %v1635
    %v1654 = vpop.f32.mrf.mxu0
    %v1655 = vadd.f32 0.0, %v1654
    %1656 = vdwg.mxu0
    %v1657 = vld [vmem:[%s1 + $0x540] sm:$0xff]
    %v1658 = vld [vmem:[%s1 + $0x550] sm:$0xff]
    %v1659 = vld [vmem:[%s1 + $0x560] sm:$0xff]
    %v1660 = vld [vmem:[%s1 + $0x570] sm:$0xff]
    %v1661 = vld [vmem:[%s1 + $0x580] sm:$0xff]
    %v1662 = vld [vmem:[%s1 + $0x590] sm:$0xff]
    %v1663 = vld [vmem:[%s1 + $0x5a0] sm:$0xff]
    %v1664 = vld [vmem:[%s1 + $0x5b0] sm:$0xff]
    %v1665 = vld [vmem:[%s2 + $0x21] ss:$0 sm:$0xff]
    %v1667 = vsel %vm93, %v1655, 0
    %1669 = vmatpush.msra.mxu0 0.0
    %1670 = vmatpush.msra.mxu0 0.0
    %1671 = vmatpush.msra.mxu0 0.0
    %1672 = vmatpush.msra.mxu0 0.0
    %1673 = vmatpush.msra.mxu0 0.0
    %1674 = vmatpush.msra.mxu0 0.0
    %1675 = vmatpush.msra.mxu0 0.0
    %1676 = vmatpush.msra.mxu0 0.0
    %1677 = vmatpush.msra.mxu0 %v1664
    %1678 = vmatpush.msra.mxu0 %v1663
    %1679 = vmatpush.msra.mxu0 %v1662
    %1680 = vmatpush.msra.mxu0 %v1661
    %1681 = vmatpush.msra.mxu0 %v1660
    %1682 = vmatpush.msra.mxu0 %v1659
    %1683 = vmatpush.msra.mxu0 %v1658
    %1684 = vmatpush.msra.mxu0 %v1657
    %1685 = vmatmul.f32.gmra.mxu0 %v1667
    %v1686 = vpop.f32.mrf.mxu0
    %v1687 = vadd.f32 %v1665, %v1686
    %1688 = vdwg.mxu0
    %vm1689 = vcmask 1041408
    %v1690 = vsel %vm1689, %v1687, -inf
    %1691 = vmax.xlane.f32.xlu0 %v1690
    %v1692 = vpop.xlane.xlu0 %1691
    %v1693 = vsub.f32 %v1687, %v1692
    %v1694 = vmul.f32 %v1693, 1.442695
    %v1695 = vpow.pop %v1694
    %v1696 = vsel %vm1689, %v1695, 0.0
    %1697 = vadd.xlane.f32.xlu0 %v1696
    %v1698 = vpop.xlane.xlu0 %1697
    %v1699 = vrcp.pop %v1698
    %v1700 = vmul.f32 %v1698, %v1699
    %v1701 = vsub.f32 1.0, %v1700
    %v1702 = vmul.f32 %v1699, %v1701
    %v1703 = vadd.f32 %v1699, %v1702
    %vm1704 = vweird.f32 %v1698
    %vm1705 = vweird.f32 %v1699
    %vm1706 = vmor %vm1704, %vm1705
    %v1707 = vsel %vm1706, %v1699, %v1703
    %v1708 = vand.u32 2147483647, %v1698
    %vm1709 = vcmp.eq.f32.partialorder %v1708, 8.507059e+37
    %v1710 = vand.u32 %v1698, 2147483648
    %v1711 = vor.u32 1.1754944e-38, %v1710
    %v1712 = vsel %vm1709, %v1711, %v1707
    %v1713 = vmul.f32 %v1695, %v1712
    %1714 = vst [vmem:[#allocation2] sm:$0x3] %v1713
    // Predicated region
    $region14: #{transformer_prediction.1} parent=1 // pred_check
      _
    $region15: #{transformer_prediction.1} parent=1 // pred_check_branch
      %1716 = sbr.rel (0) target = $region17
    $region16: #{transformer_prediction.1} parent=1 // pred_region
      %1718 = vsyncadd [#allocation3], 0
      %s1720 = sshll.u32 [#allocation2], 4
      %s1721 = int_to_ptr.vmem [resolvable:$true] %s1720
      %s1722 = sshll.u32 %s3, 4
      %s1723 = int_to_ptr.hbm [resolvable:$true] %s1722
      %1725 = dma.vmem_to_hbm [thread:$0]  %s1721, 32, %s1723, [#allocation3]
    $region17: #{transformer_prediction.1} parent=1 // pred_fallthru
      _
    // Predicated region
    $region18: #{transformer_prediction.1} parent=1 // pred_check
      _
    $region19: #{transformer_prediction.1} parent=1 // pred_check_branch
      %1727 = sbr.rel (0) target = $region21
    $region20: #{transformer_prediction.1} parent=1 // pred_region
      %1729 = dma.done [#allocation3], 32
    $region21: #{transformer_prediction.1} parent=1 // pred_fallthru
      _
    %1730 = vsyncpa [#allocation3], 1

</llo_original>
